<compile_context>
chip_gen: v7x
topology: tpu7x:2x2x1
jax: 0.10.0
libtpu: 0.0.40
codegen_flags: <defaults>
</compile_context>

<pallas_src>
import numpy as np
import jax
import jax.numpy as jnp
from jax.experimental import pallas as pl
from jax.experimental.pallas import tpu as pltpu

TB = 8  # batch tile; multiple of 8 so all sublane merges/splits are layout-free

# per layer: (W_in, OW, Cin, Cout); spatial 28 -> 14 -> 7 -> 4, channels 1 -> 16
_LAYERS = ((28, 14, 1, 16), (14, 7, 16, 16), (7, 4, 16, 16))


# ------------------------------ Pallas kernel -------------------------------

def _fused_kernel(x_ref, band1_ref, brow1_ref, band2_ref, brow2_ref,
                  band3_ref, brow3_ref, pool_ref, o_ref,
                  xpad2_ref, xpad3_ref):
    """One batch tile: conv1+ReLU -> conv2+ReLU -> conv3+ReLU -> 4x4 avg pool."""

    def conv_band_relu(src_ref, band_ref, brow_ref, oh, wc_in, wc_out):
        # src_ref: (Hp, TB, W_in*Cin) H-padded activation (lane dim = w*Cin+ci).
        # For each kernel row dy, pick rows dy, dy+2, ... (stride-2 in H) via a
        # leading-dim reshape (layout-free) and contract (w, ci) jointly with a
        # precomputed banded weight matrix on the MXU.
        acc = None
        for dy in range(3):
            sl = src_ref[dy:dy + 2 * oh, :, :]                # (2*oh, TB, wc_in)
            sel = sl.reshape(oh, 2, TB, wc_in)[:, 0]          # rows dy, dy+2, ...
            rows = sel.reshape(oh * TB, wc_in)                # (oh*TB, wc_in)
            part = jnp.dot(rows, band_ref[dy],                # (oh*TB, wc_out)
                           preferred_element_type=jnp.float32)
            acc = part if acc is None else acc + part
        return jnp.maximum(acc + brow_ref[...], 0.0)

    # Zero only the H-padding rows of the VMEM-resident activations.  Done every
    # grid step (a few vector stores) so it is safe under megacore partitioning.
    xpad2_ref[0:1, :, :] = jnp.zeros((1, TB, 224), jnp.float32)
    xpad2_ref[15:16, :, :] = jnp.zeros((1, TB, 224), jnp.float32)
    xpad3_ref[0:1, :, :] = jnp.zeros((1, TB, 112), jnp.float32)
    xpad3_ref[8:10, :, :] = jnp.zeros((2, TB, 112), jnp.float32)  # pad + slack row

    # layer 1: (30, TB, 28) -> (14*TB, 224); result stays in VMEM scratch.
    h1 = conv_band_relu(x_ref, band1_ref, brow1_ref, 14, 28, 224)
    xpad2_ref[1:15, :, :] = h1.reshape(14, TB, 224)

    # layer 2: (16, TB, 224) -> (7*TB, 112)
    h2 = conv_band_relu(xpad2_ref, band2_ref, brow2_ref, 7, 224, 112)
    xpad3_ref[1:8, :, :] = h2.reshape(7, TB, 112)

    # layer 3: (10, TB, 112) -> (4*TB, 64)   (lane index = ow*16 + co)
    h3 = conv_band_relu(xpad3_ref, band3_ref, brow3_ref, 4, 112, 64)

    # Fused global 4x4 average pool: the pool matrix sums the ow groups (and
    # applies 1/16); the reshape + sum folds the oh rows -> (TB, 16).
    pooled = jnp.dot(h3, pool_ref[...], preferred_element_type=jnp.float32)
    o_ref[...] = jnp.sum(pooled.reshape(4, TB, 16), axis=0)


# ------------------------- weight preprocessing (host) ----------------------

def prepare_params(params):
    """Fold conv weights into per-dy banded matmul matrices + tiled bias rows.

    band[dy, w_un*Cin + ci, ow*Cout + co] = w[co, ci, dy, dx] with
    dx = w_un + 1 - 2*ow (pad=1, stride=2); out-of-range taps (W padding) are
    simply absent, so the kernel only needs H padding in its scratch.
    """
    ops = []
    for (w, b), (w_in, ow_n, cin, cout) in zip(params, _LAYERS):
        w_np = np.asarray(w, np.float32)            # (Cout, Cin, 3, 3)
        b_np = np.asarray(b, np.float32)
        band = np.zeros((3, w_in * cin, ow_n * cout), np.float32)
        for dy in range(3):
            for ow in range(ow_n):
                for dx in range(3):
                    w_un = 2 * ow + dx - 1          # unpadded input column
                    if 0 <= w_un < w_in:
                        band[dy,
                             w_un * cin:(w_un + 1) * cin,
                             ow * cout:(ow + 1) * cout] = w_np[:, :, dy, dx].T
        brow = np.tile(b_np, ow_n).reshape(1, ow_n * cout)
        ops += [jnp.asarray(band), jnp.asarray(brow)]
    pool = np.tile(np.eye(16, dtype=np.float32), (4, 1)) / 16.0   # (64, 16)
    ops.append(jnp.asarray(pool))
    return tuple(ops)


# --------------------------------- wrapper -----------------------------------

def mnist_cnn_forward(x, prepared):
    """x: (B, 784) float32 -> (B, 16); equivalent to Mnist_CNN.forward."""
    band1, brow1, band2, brow2, band3, brow3, pool = prepared
    B = x.shape[0]
    b_pad = ((B + TB - 1) // TB) * TB
    imgs = x.reshape(B, 28, 28)
    if b_pad != B:
        imgs = jnp.pad(imgs, ((0, b_pad - B), (0, 0), (0, 0)))
    # (H, B, W) layout with H zero-padding baked in -> (30, b_pad, 28)
    x_t = jnp.pad(jnp.transpose(imgs, (1, 0, 2)), ((1, 1), (0, 0), (0, 0)))

    grid = (b_pad // TB,)
    flops = int(b_pad * (2 * 3 * (14 * 28 * 224 + 7 * 224 * 112 + 4 * 112 * 64)
                         + 2 * 4 * 64 * 16))
    bytes_accessed = int(x_t.size * 4 + b_pad * 16 * 4
                         + sum(a.size for a in prepared) * 4)

    out = pl.pallas_call(
        _fused_kernel,
        out_shape=jax.ShapeDtypeStruct((b_pad, 16), jnp.float32),
        grid_spec=pltpu.PrefetchScalarGridSpec(
            num_scalar_prefetch=0,
            grid=grid,
            in_specs=[
                # batch-tiled input, pipelined/double-buffered across the grid
                pl.BlockSpec((30, TB, 28), lambda i: (0, i, 0)),
                # weights / biases / pool matrix: single VMEM-resident blocks
                pl.BlockSpec((3, 28, 224), lambda i: (0, 0, 0)),
                pl.BlockSpec((1, 224), lambda i: (0, 0)),
                pl.BlockSpec((3, 224, 112), lambda i: (0, 0, 0)),
                pl.BlockSpec((1, 112), lambda i: (0, 0)),
                pl.BlockSpec((3, 112, 64), lambda i: (0, 0, 0)),
                pl.BlockSpec((1, 64), lambda i: (0, 0)),
                pl.BlockSpec((64, 16), lambda i: (0, 0)),
            ],
            out_specs=pl.BlockSpec((TB, 16), lambda i: (i, 0)),
            scratch_shapes=[
                pltpu.VMEM((16, TB, 224), jnp.float32),   # layer-1 output, H-padded
                pltpu.VMEM((10, TB, 112), jnp.float32),   # layer-2 output, H-padded
            ],
        ),
        compiler_params=pltpu.CompilerParams(
            dimension_semantics=("parallel",),          # megacore on v7x
            vmem_limit_bytes=32 * 1024 * 1024,
        ),
        cost_estimate=pl.CostEstimate(flops=flops, transcendentals=0,
                                      bytes_accessed=bytes_accessed),
    )(x_t, band1, brow1, band2, brow2, band3, brow3, pool)
    return out[:B]


# ------------------------- params / reference / main ------------------------

def init_params(key):
    params = []
    shapes = [(16, 1, 3, 3), (16, 16, 3, 3), (16, 16, 3, 3)]
    for shp in shapes:
        key, kw_, kb_ = jax.random.split(key, 3)
        fan_in = shp[1] * shp[2] * shp[3]
        bound = 1.0 / (fan_in ** 0.5)
        w = jax.random.uniform(kw_, shp, jnp.float32, -bound, bound)
        b = jax.random.uniform(kb_, (shp[0],), jnp.float32, -bound, bound)
        params.append((w, b))
    return params


def reference_forward(x, params):
    B = x.shape[0]
    h = x.reshape(B, 1, 28, 28)
    for (w, b) in params:
        h = jax.lax.conv_general_dilated(
            h, w, window_strides=(2, 2), padding=((1, 1), (1, 1)),
            dimension_numbers=("NCHW", "OIHW", "NCHW"))
        h = jnp.maximum(h + b[None, :, None, None], 0.0)
    return jnp.mean(h, axis=(2, 3))                 # avg_pool2d(4) over 4x4


if __name__ == "__main__":
    key = jax.random.PRNGKey(0)
    key_x, key_p = jax.random.split(key)
    B = 2
    x = jax.random.normal(key_x, (B, 784), dtype=jnp.float32)  # flattened 28x28
    params = init_params(key_p)
    prepared = prepare_params(params)

    fwd = jax.jit(mnist_cnn_forward)
    out = jax.block_until_ready(fwd(x, prepared))
    ref = jax.block_until_ready(reference_forward(x, params))

    assert out.shape == (B, 16), out.shape
    assert jnp.allclose(out, ref, rtol=1e-3, atol=1e-3), "mismatch vs XLA reference"
    print("KERNEL_OK")
</pallas_src>

<mosaic_0001>
module attributes {stable_mosaic.version = 11 : i64} {
  func.func @_fused_kernel(%arg0: i32, %arg1: memref<30x8x28xf32, #tpu.memory_space<vmem>>, %arg2: memref<3x28x224xf32, #tpu.memory_space<vmem>>, %arg3: memref<1x224xf32, #tpu.memory_space<vmem>>, %arg4: memref<3x224x112xf32, #tpu.memory_space<vmem>>, %arg5: memref<1x112xf32, #tpu.memory_space<vmem>>, %arg6: memref<3x112x64xf32, #tpu.memory_space<vmem>>, %arg7: memref<1x64xf32, #tpu.memory_space<vmem>>, %arg8: memref<64x16xf32, #tpu.memory_space<vmem>>, %arg9: memref<8x16xf32, #tpu.memory_space<vmem>>, %arg10: memref<16x8x224xf32, #tpu.memory_space<vmem>>, %arg11: memref<10x8x112xf32, #tpu.memory_space<vmem>>) attributes {dimension_semantics = [#tpu.dimension_semantics<parallel>], iteration_bounds = array<i64: 1>, scalar_prefetch = 0 : i64, scratch_operands = 2 : i64, tpu.core_type = #tpu.core_type<tc>, window_params = [{transform_indices = @transform_0, window_bounds = array<i64: 30, 8, 28>}, {pipeline_mode = #tpu.pipeline_mode<synchronous>, transform_indices = @transform_1, window_bounds = array<i64: 3, 28, 224>}, {pipeline_mode = #tpu.pipeline_mode<synchronous>, transform_indices = @transform_2, window_bounds = array<i64: 1, 224>}, {pipeline_mode = #tpu.pipeline_mode<synchronous>, transform_indices = @transform_3, window_bounds = array<i64: 3, 224, 112>}, {pipeline_mode = #tpu.pipeline_mode<synchronous>, transform_indices = @transform_4, window_bounds = array<i64: 1, 112>}, {pipeline_mode = #tpu.pipeline_mode<synchronous>, transform_indices = @transform_5, window_bounds = array<i64: 3, 112, 64>}, {pipeline_mode = #tpu.pipeline_mode<synchronous>, transform_indices = @transform_6, window_bounds = array<i64: 1, 64>}, {pipeline_mode = #tpu.pipeline_mode<synchronous>, transform_indices = @transform_7, window_bounds = array<i64: 64, 16>}, {transform_indices = @transform_8, window_bounds = array<i64: 8, 16>}]} {
    %cst = arith.constant 0.000000e+00 : f32
    %0 = vector.broadcast %cst : f32 to vector<1x8x224xf32>
    %c0 = arith.constant 0 : index
    %c0_0 = arith.constant 0 : index
    %c0_1 = arith.constant 0 : index
    %1 = vector.load %arg10[%c0, %c0_0, %c0_1] : memref<16x8x224xf32, #tpu.memory_space<vmem>>, vector<1x8x224xf32>
    tpu.vector_store %arg10[%c0, %c0_0, %c0_1], %0 {strides = array<i32>} : memref<16x8x224xf32, #tpu.memory_space<vmem>>, vector<1x8x224xf32>,
    %cst_2 = arith.constant 0.000000e+00 : f32
    %2 = vector.broadcast %cst_2 : f32 to vector<1x8x224xf32>
    %c15 = arith.constant 15 : index
    %c0_3 = arith.constant 0 : index
    %c0_4 = arith.constant 0 : index
    %3 = vector.load %arg10[%c15, %c0_3, %c0_4] : memref<16x8x224xf32, #tpu.memory_space<vmem>>, vector<1x8x224xf32>
    tpu.vector_store %arg10[%c15, %c0_3, %c0_4], %2 {strides = array<i32>} : memref<16x8x224xf32, #tpu.memory_space<vmem>>, vector<1x8x224xf32>,
    %cst_5 = arith.constant 0.000000e+00 : f32
    %4 = vector.broadcast %cst_5 : f32 to vector<1x8x112xf32>
    %c0_6 = arith.constant 0 : index
    %c0_7 = arith.constant 0 : index
    %c0_8 = arith.constant 0 : index
    %5 = vector.load %arg11[%c0_6, %c0_7, %c0_8] : memref<10x8x112xf32, #tpu.memory_space<vmem>>, vector<1x8x112xf32>
    tpu.vector_store %arg11[%c0_6, %c0_7, %c0_8], %4 {strides = array<i32>} : memref<10x8x112xf32, #tpu.memory_space<vmem>>, vector<1x8x112xf32>,
    %cst_9 = arith.constant 0.000000e+00 : f32
    %6 = vector.broadcast %cst_9 : f32 to vector<2x8x112xf32>
    %c8 = arith.constant 8 : index
    %c0_10 = arith.constant 0 : index
    %c0_11 = arith.constant 0 : index
    %7 = vector.load %arg11[%c8, %c0_10, %c0_11] : memref<10x8x112xf32, #tpu.memory_space<vmem>>, vector<2x8x112xf32>
    tpu.vector_store %arg11[%c8, %c0_10, %c0_11], %6 {strides = array<i32>} : memref<10x8x112xf32, #tpu.memory_space<vmem>>, vector<2x8x112xf32>,
    %c0_12 = arith.constant 0 : index
    %c0_13 = arith.constant 0 : index
    %c0_14 = arith.constant 0 : index
    %8 = vector.load %arg1[%c0_12, %c0_13, %c0_14] : memref<30x8x28xf32, #tpu.memory_space<vmem>>, vector<28x8x28xf32>
    %9 = vector.shape_cast %8 : vector<28x8x28xf32> to vector<14x2x8x28xf32>
    %10 = vector.extract_strided_slice %9 {offsets = [0, 0, 0, 0], sizes = [14, 1, 8, 28], strides = [1, 1, 1, 1]} : vector<14x2x8x28xf32> to vector<14x1x8x28xf32>
    %11 = vector.shape_cast %10 : vector<14x1x8x28xf32> to vector<14x8x28xf32>
    %12 = vector.shape_cast %11 : vector<14x8x28xf32> to vector<112x28xf32>
    %c0_15 = arith.constant 0 : index
    %c0_16 = arith.constant 0 : index
    %c0_17 = arith.constant 0 : index
    %13 = vector.load %arg2[%c0_15, %c0_16, %c0_17] : memref<3x28x224xf32, #tpu.memory_space<vmem>>, vector<1x28x224xf32>
    %14 = vector.shape_cast %13 : vector<1x28x224xf32> to vector<28x224xf32>
    %cst_18 = arith.constant dense<0.000000e+00> : vector<112x224xf32>
    %15 = tpu.matmul %12, %14, %cst_18 {dimension_numbers = #tpu.dot_dimension_numbers<[1], [0], [0], [1], [0, 0, 1, 1], [], []>} : vector<112x28xf32>, vector<28x224xf32>, vector<112x224xf32> -> vector<112x224xf32>
    %c1 = arith.constant 1 : index
    %c0_19 = arith.constant 0 : index
    %c0_20 = arith.constant 0 : index
    %16 = vector.load %arg1[%c1, %c0_19, %c0_20] : memref<30x8x28xf32, #tpu.memory_space<vmem>>, vector<28x8x28xf32>
    %17 = vector.shape_cast %16 : vector<28x8x28xf32> to vector<14x2x8x28xf32>
    %18 = vector.extract_strided_slice %17 {offsets = [0, 0, 0, 0], sizes = [14, 1, 8, 28], strides = [1, 1, 1, 1]} : vector<14x2x8x28xf32> to vector<14x1x8x28xf32>
    %19 = vector.shape_cast %18 : vector<14x1x8x28xf32> to vector<14x8x28xf32>
    %20 = vector.shape_cast %19 : vector<14x8x28xf32> to vector<112x28xf32>
    %c1_21 = arith.constant 1 : index
    %c0_22 = arith.constant 0 : index
    %c0_23 = arith.constant 0 : index
    %21 = vector.load %arg2[%c1_21, %c0_22, %c0_23] : memref<3x28x224xf32, #tpu.memory_space<vmem>>, vector<1x28x224xf32>
    %22 = vector.shape_cast %21 : vector<1x28x224xf32> to vector<28x224xf32>
    %cst_24 = arith.constant dense<0.000000e+00> : vector<112x224xf32>
    %23 = tpu.matmul %20, %22, %cst_24 {dimension_numbers = #tpu.dot_dimension_numbers<[1], [0], [0], [1], [0, 0, 1, 1], [], []>} : vector<112x28xf32>, vector<28x224xf32>, vector<112x224xf32> -> vector<112x224xf32>
    %24 = arith.addf %15, %23 : vector<112x224xf32>
    %c2 = arith.constant 2 : index
    %c0_25 = arith.constant 0 : index
    %c0_26 = arith.constant 0 : index
    %25 = vector.load %arg1[%c2, %c0_25, %c0_26] : memref<30x8x28xf32, #tpu.memory_space<vmem>>, vector<28x8x28xf32>
    %26 = vector.shape_cast %25 : vector<28x8x28xf32> to vector<14x2x8x28xf32>
    %27 = vector.extract_strided_slice %26 {offsets = [0, 0, 0, 0], sizes = [14, 1, 8, 28], strides = [1, 1, 1, 1]} : vector<14x2x8x28xf32> to vector<14x1x8x28xf32>
    %28 = vector.shape_cast %27 : vector<14x1x8x28xf32> to vector<14x8x28xf32>
    %29 = vector.shape_cast %28 : vector<14x8x28xf32> to vector<112x28xf32>
    %c2_27 = arith.constant 2 : index
    %c0_28 = arith.constant 0 : index
    %c0_29 = arith.constant 0 : index
    %30 = vector.load %arg2[%c2_27, %c0_28, %c0_29] : memref<3x28x224xf32, #tpu.memory_space<vmem>>, vector<1x28x224xf32>
    %31 = vector.shape_cast %30 : vector<1x28x224xf32> to vector<28x224xf32>
    %cst_30 = arith.constant dense<0.000000e+00> : vector<112x224xf32>
    %32 = tpu.matmul %29, %31, %cst_30 {dimension_numbers = #tpu.dot_dimension_numbers<[1], [0], [0], [1], [0, 0, 1, 1], [], []>} : vector<112x28xf32>, vector<28x224xf32>, vector<112x224xf32> -> vector<112x224xf32>
    %33 = arith.addf %24, %32 : vector<112x224xf32>
    %c0_31 = arith.constant 0 : index
    %c0_32 = arith.constant 0 : index
    %34 = vector.load %arg3[%c0_31, %c0_32] : memref<1x224xf32, #tpu.memory_space<vmem>>, vector<1x224xf32>
    %35 = vector.broadcast %34 : vector<1x224xf32> to vector<112x224xf32>
    %36 = arith.addf %33, %35 : vector<112x224xf32>
    %cst_33 = arith.constant 0.000000e+00 : f32
    %37 = vector.broadcast %cst_33 : f32 to vector<112x224xf32>
    %38 = arith.maximumf %36, %37 : vector<112x224xf32>
    %39 = vector.shape_cast %38 : vector<112x224xf32> to vector<14x8x224xf32>
    %c1_34 = arith.constant 1 : index
    %c0_35 = arith.constant 0 : index
    %c0_36 = arith.constant 0 : index
    %40 = vector.load %arg10[%c1_34, %c0_35, %c0_36] : memref<16x8x224xf32, #tpu.memory_space<vmem>>, vector<14x8x224xf32>
    tpu.vector_store %arg10[%c1_34, %c0_35, %c0_36], %39 {strides = array<i32>} : memref<16x8x224xf32, #tpu.memory_space<vmem>>, vector<14x8x224xf32>,
    %c0_37 = arith.constant 0 : index
    %c0_38 = arith.constant 0 : index
    %c0_39 = arith.constant 0 : index
    %41 = vector.load %arg10[%c0_37, %c0_38, %c0_39] : memref<16x8x224xf32, #tpu.memory_space<vmem>>, vector<14x8x224xf32>
    %42 = vector.shape_cast %41 : vector<14x8x224xf32> to vector<7x2x8x224xf32>
    %43 = vector.extract_strided_slice %42 {offsets = [0, 0, 0, 0], sizes = [7, 1, 8, 224], strides = [1, 1, 1, 1]} : vector<7x2x8x224xf32> to vector<7x1x8x224xf32>
    %44 = vector.shape_cast %43 : vector<7x1x8x224xf32> to vector<7x8x224xf32>
    %45 = vector.shape_cast %44 : vector<7x8x224xf32> to vector<56x224xf32>
    %c0_40 = arith.constant 0 : index
    %c0_41 = arith.constant 0 : index
    %c0_42 = arith.constant 0 : index
    %46 = vector.load %arg4[%c0_40, %c0_41, %c0_42] : memref<3x224x112xf32, #tpu.memory_space<vmem>>, vector<1x224x112xf32>
    %47 = vector.shape_cast %46 : vector<1x224x112xf32> to vector<224x112xf32>
    %cst_43 = arith.constant dense<0.000000e+00> : vector<56x112xf32>
    %48 = tpu.matmul %45, %47, %cst_43 {dimension_numbers = #tpu.dot_dimension_numbers<[1], [0], [0], [1], [0, 0, 1, 1], [], []>} : vector<56x224xf32>, vector<224x112xf32>, vector<56x112xf32> -> vector<56x112xf32>
    %c1_44 = arith.constant 1 : index
    %c0_45 = arith.constant 0 : index
    %c0_46 = arith.constant 0 : index
    %49 = vector.load %arg10[%c1_44, %c0_45, %c0_46] : memref<16x8x224xf32, #tpu.memory_space<vmem>>, vector<14x8x224xf32>
    %50 = vector.shape_cast %49 : vector<14x8x224xf32> to vector<7x2x8x224xf32>
    %51 = vector.extract_strided_slice %50 {offsets = [0, 0, 0, 0], sizes = [7, 1, 8, 224], strides = [1, 1, 1, 1]} : vector<7x2x8x224xf32> to vector<7x1x8x224xf32>
    %52 = vector.shape_cast %51 : vector<7x1x8x224xf32> to vector<7x8x224xf32>
    %53 = vector.shape_cast %52 : vector<7x8x224xf32> to vector<56x224xf32>
    %c1_47 = arith.constant 1 : index
    %c0_48 = arith.constant 0 : index
    %c0_49 = arith.constant 0 : index
    %54 = vector.load %arg4[%c1_47, %c0_48, %c0_49] : memref<3x224x112xf32, #tpu.memory_space<vmem>>, vector<1x224x112xf32>
    %55 = vector.shape_cast %54 : vector<1x224x112xf32> to vector<224x112xf32>
    %cst_50 = arith.constant dense<0.000000e+00> : vector<56x112xf32>
    %56 = tpu.matmul %53, %55, %cst_50 {dimension_numbers = #tpu.dot_dimension_numbers<[1], [0], [0], [1], [0, 0, 1, 1], [], []>} : vector<56x224xf32>, vector<224x112xf32>, vector<56x112xf32> -> vector<56x112xf32>
    %57 = arith.addf %48, %56 : vector<56x112xf32>
    %c2_51 = arith.constant 2 : index
    %c0_52 = arith.constant 0 : index
    %c0_53 = arith.constant 0 : index
    %58 = vector.load %arg10[%c2_51, %c0_52, %c0_53] : memref<16x8x224xf32, #tpu.memory_space<vmem>>, vector<14x8x224xf32>
    %59 = vector.shape_cast %58 : vector<14x8x224xf32> to vector<7x2x8x224xf32>
    %60 = vector.extract_strided_slice %59 {offsets = [0, 0, 0, 0], sizes = [7, 1, 8, 224], strides = [1, 1, 1, 1]} : vector<7x2x8x224xf32> to vector<7x1x8x224xf32>
    %61 = vector.shape_cast %60 : vector<7x1x8x224xf32> to vector<7x8x224xf32>
    %62 = vector.shape_cast %61 : vector<7x8x224xf32> to vector<56x224xf32>
    %c2_54 = arith.constant 2 : index
    %c0_55 = arith.constant 0 : index
    %c0_56 = arith.constant 0 : index
    %63 = vector.load %arg4[%c2_54, %c0_55, %c0_56] : memref<3x224x112xf32, #tpu.memory_space<vmem>>, vector<1x224x112xf32>
    %64 = vector.shape_cast %63 : vector<1x224x112xf32> to vector<224x112xf32>
    %cst_57 = arith.constant dense<0.000000e+00> : vector<56x112xf32>
    %65 = tpu.matmul %62, %64, %cst_57 {dimension_numbers = #tpu.dot_dimension_numbers<[1], [0], [0], [1], [0, 0, 1, 1], [], []>} : vector<56x224xf32>, vector<224x112xf32>, vector<56x112xf32> -> vector<56x112xf32>
    %66 = arith.addf %57, %65 : vector<56x112xf32>
    %c0_58 = arith.constant 0 : index
    %c0_59 = arith.constant 0 : index
    %67 = vector.load %arg5[%c0_58, %c0_59] : memref<1x112xf32, #tpu.memory_space<vmem>>, vector<1x112xf32>
    %68 = vector.broadcast %67 : vector<1x112xf32> to vector<56x112xf32>
    %69 = arith.addf %66, %68 : vector<56x112xf32>
    %cst_60 = arith.constant 0.000000e+00 : f32
    %70 = vector.broadcast %cst_60 : f32 to vector<56x112xf32>
    %71 = arith.maximumf %69, %70 : vector<56x112xf32>
    %72 = vector.shape_cast %71 : vector<56x112xf32> to vector<7x8x112xf32>
    %c1_61 = arith.constant 1 : index
    %c0_62 = arith.constant 0 : index
    %c0_63 = arith.constant 0 : index
    %73 = vector.load %arg11[%c1_61, %c0_62, %c0_63] : memref<10x8x112xf32, #tpu.memory_space<vmem>>, vector<7x8x112xf32>
    tpu.vector_store %arg11[%c1_61, %c0_62, %c0_63], %72 {strides = array<i32>} : memref<10x8x112xf32, #tpu.memory_space<vmem>>, vector<7x8x112xf32>,
    %c0_64 = arith.constant 0 : index
    %c0_65 = arith.constant 0 : index
    %c0_66 = arith.constant 0 : index
    %74 = vector.load %arg11[%c0_64, %c0_65, %c0_66] : memref<10x8x112xf32, #tpu.memory_space<vmem>>, vector<8x8x112xf32>
    %75 = vector.shape_cast %74 : vector<8x8x112xf32> to vector<4x2x8x112xf32>
    %76 = vector.extract_strided_slice %75 {offsets = [0, 0, 0, 0], sizes = [4, 1, 8, 112], strides = [1, 1, 1, 1]} : vector<4x2x8x112xf32> to vector<4x1x8x112xf32>
    %77 = vector.shape_cast %76 : vector<4x1x8x112xf32> to vector<4x8x112xf32>
    %78 = vector.shape_cast %77 : vector<4x8x112xf32> to vector<32x112xf32>
    %c0_67 = arith.constant 0 : index
    %c0_68 = arith.constant 0 : index
    %c0_69 = arith.constant 0 : index
    %79 = vector.load %arg6[%c0_67, %c0_68, %c0_69] : memref<3x112x64xf32, #tpu.memory_space<vmem>>, vector<1x112x64xf32>
    %80 = vector.shape_cast %79 : vector<1x112x64xf32> to vector<112x64xf32>
    %cst_70 = arith.constant dense<0.000000e+00> : vector<32x64xf32>
    %81 = tpu.matmul %78, %80, %cst_70 {dimension_numbers = #tpu.dot_dimension_numbers<[1], [0], [0], [1], [0, 0, 1, 1], [], []>} : vector<32x112xf32>, vector<112x64xf32>, vector<32x64xf32> -> vector<32x64xf32>
    %c1_71 = arith.constant 1 : index
    %c0_72 = arith.constant 0 : index
    %c0_73 = arith.constant 0 : index
    %82 = vector.load %arg11[%c1_71, %c0_72, %c0_73] : memref<10x8x112xf32, #tpu.memory_space<vmem>>, vector<8x8x112xf32>
    %83 = vector.shape_cast %82 : vector<8x8x112xf32> to vector<4x2x8x112xf32>
    %84 = vector.extract_strided_slice %83 {offsets = [0, 0, 0, 0], sizes = [4, 1, 8, 112], strides = [1, 1, 1, 1]} : vector<4x2x8x112xf32> to vector<4x1x8x112xf32>
    %85 = vector.shape_cast %84 : vector<4x1x8x112xf32> to vector<4x8x112xf32>
    %86 = vector.shape_cast %85 : vector<4x8x112xf32> to vector<32x112xf32>
    %c1_74 = arith.constant 1 : index
    %c0_75 = arith.constant 0 : index
    %c0_76 = arith.constant 0 : index
    %87 = vector.load %arg6[%c1_74, %c0_75, %c0_76] : memref<3x112x64xf32, #tpu.memory_space<vmem>>, vector<1x112x64xf32>
    %88 = vector.shape_cast %87 : vector<1x112x64xf32> to vector<112x64xf32>
    %cst_77 = arith.constant dense<0.000000e+00> : vector<32x64xf32>
    %89 = tpu.matmul %86, %88, %cst_77 {dimension_numbers = #tpu.dot_dimension_numbers<[1], [0], [0], [1], [0, 0, 1, 1], [], []>} : vector<32x112xf32>, vector<112x64xf32>, vector<32x64xf32> -> vector<32x64xf32>
    %90 = arith.addf %81, %89 : vector<32x64xf32>
    %c2_78 = arith.constant 2 : index
    %c0_79 = arith.constant 0 : index
    %c0_80 = arith.constant 0 : index
    %91 = vector.load %arg11[%c2_78, %c0_79, %c0_80] : memref<10x8x112xf32, #tpu.memory_space<vmem>>, vector<8x8x112xf32>
    %92 = vector.shape_cast %91 : vector<8x8x112xf32> to vector<4x2x8x112xf32>
    %93 = vector.extract_strided_slice %92 {offsets = [0, 0, 0, 0], sizes = [4, 1, 8, 112], strides = [1, 1, 1, 1]} : vector<4x2x8x112xf32> to vector<4x1x8x112xf32>
    %94 = vector.shape_cast %93 : vector<4x1x8x112xf32> to vector<4x8x112xf32>
    %95 = vector.shape_cast %94 : vector<4x8x112xf32> to vector<32x112xf32>
    %c2_81 = arith.constant 2 : index
    %c0_82 = arith.constant 0 : index
    %c0_83 = arith.constant 0 : index
    %96 = vector.load %arg6[%c2_81, %c0_82, %c0_83] : memref<3x112x64xf32, #tpu.memory_space<vmem>>, vector<1x112x64xf32>
    %97 = vector.shape_cast %96 : vector<1x112x64xf32> to vector<112x64xf32>
    %cst_84 = arith.constant dense<0.000000e+00> : vector<32x64xf32>
    %98 = tpu.matmul %95, %97, %cst_84 {dimension_numbers = #tpu.dot_dimension_numbers<[1], [0], [0], [1], [0, 0, 1, 1], [], []>} : vector<32x112xf32>, vector<112x64xf32>, vector<32x64xf32> -> vector<32x64xf32>
    %99 = arith.addf %90, %98 : vector<32x64xf32>
    %c0_85 = arith.constant 0 : index
    %c0_86 = arith.constant 0 : index
    %100 = vector.load %arg7[%c0_85, %c0_86] : memref<1x64xf32, #tpu.memory_space<vmem>>, vector<1x64xf32>
    %101 = vector.broadcast %100 : vector<1x64xf32> to vector<32x64xf32>
    %102 = arith.addf %99, %101 : vector<32x64xf32>
    %cst_87 = arith.constant 0.000000e+00 : f32
    %103 = vector.broadcast %cst_87 : f32 to vector<32x64xf32>
    %104 = arith.maximumf %102, %103 : vector<32x64xf32>
    %c0_88 = arith.constant 0 : index
    %c0_89 = arith.constant 0 : index
    %105 = vector.load %arg8[%c0_88, %c0_89] : memref<64x16xf32, #tpu.memory_space<vmem>>, vector<64x16xf32>
    %cst_90 = arith.constant dense<0.000000e+00> : vector<32x16xf32>
    %106 = tpu.matmul %104, %105, %cst_90 {dimension_numbers = #tpu.dot_dimension_numbers<[1], [0], [0], [1], [0, 0, 1, 1], [], []>} : vector<32x64xf32>, vector<64x16xf32>, vector<32x16xf32> -> vector<32x16xf32>
    %107 = vector.shape_cast %106 : vector<32x16xf32> to vector<4x8x16xf32>
    %cst_91 = arith.constant dense<0.000000e+00> : vector<8x16xf32>
    %108 = vector.multi_reduction <add>, %107, %cst_91 [0] : vector<4x8x16xf32> to vector<8x16xf32>
    %c0_92 = arith.constant 0 : index
    %c0_93 = arith.constant 0 : index
    %109 = vector.load %arg9[%c0_92, %c0_93] : memref<8x16xf32, #tpu.memory_space<vmem>>, vector<8x16xf32>
    tpu.vector_store %arg9[%c0_92, %c0_93], %108 {strides = array<i32>} : memref<8x16xf32, #tpu.memory_space<vmem>>, vector<8x16xf32>,
    return
  }
  func.func @transform_0(%arg0: i32) -> (i32, i32, i32) {
    %c0_i32 = arith.constant 0 : i32
    %c0_i32_0 = arith.constant 0 : i32
    %c0_i32_1 = arith.constant 0 : i32
    return %c0_i32, %arg0, %c0_i32_0 : i32, i32, i32
  }
  func.func @transform_1(%arg0: i32) -> (i32, i32, i32) {
    %c0_i32 = arith.constant 0 : i32
    %c0_i32_0 = arith.constant 0 : i32
    %c0_i32_1 = arith.constant 0 : i32
    %c0_i32_2 = arith.constant 0 : i32
    return %c0_i32, %c0_i32_0, %c0_i32_1 : i32, i32, i32
  }
  func.func @transform_2(%arg0: i32) -> (i32, i32) {
    %c0_i32 = arith.constant 0 : i32
    %c0_i32_0 = arith.constant 0 : i32
    %c0_i32_1 = arith.constant 0 : i32
    return %c0_i32, %c0_i32_0 : i32, i32
  }
  func.func @transform_3(%arg0: i32) -> (i32, i32, i32) {
    %c0_i32 = arith.constant 0 : i32
    %c0_i32_0 = arith.constant 0 : i32
    %c0_i32_1 = arith.constant 0 : i32
    %c0_i32_2 = arith.constant 0 : i32
    return %c0_i32, %c0_i32_0, %c0_i32_1 : i32, i32, i32
  }
  func.func @transform_4(%arg0: i32) -> (i32, i32) {
    %c0_i32 = arith.constant 0 : i32
    %c0_i32_0 = arith.constant 0 : i32
    %c0_i32_1 = arith.constant 0 : i32
    return %c0_i32, %c0_i32_0 : i32, i32
  }
  func.func @transform_5(%arg0: i32) -> (i32, i32, i32) {
    %c0_i32 = arith.constant 0 : i32
    %c0_i32_0 = arith.constant 0 : i32
    %c0_i32_1 = arith.constant 0 : i32
    %c0_i32_2 = arith.constant 0 : i32
    return %c0_i32, %c0_i32_0, %c0_i32_1 : i32, i32, i32
  }
  func.func @transform_6(%arg0: i32) -> (i32, i32) {
    %c0_i32 = arith.constant 0 : i32
    %c0_i32_0 = arith.constant 0 : i32
    %c0_i32_1 = arith.constant 0 : i32
    return %c0_i32, %c0_i32_0 : i32, i32
  }
  func.func @transform_7(%arg0: i32) -> (i32, i32) {
    %c0_i32 = arith.constant 0 : i32
    %c0_i32_0 = arith.constant 0 : i32
    %c0_i32_1 = arith.constant 0 : i32
    return %c0_i32, %c0_i32_0 : i32, i32
  }
  func.func @transform_8(%arg0: i32) -> (i32, i32) {
    %c0_i32 = arith.constant 0 : i32
    %c0_i32_0 = arith.constant 0 : i32
    return %arg0, %c0_i32 : i32, i32
  }
}

</mosaic_0001>

<llo_original>
// kernel: mnist_cnn_forward.1
$region0: #{mnist_cnn_forward.1}
  #allocation0 [shape = 'u32[]', space=smem, size = 0x4, offset = 0x4, fixed_abs, tag = 'smem constant byte address 0x4 - core index']
  #allocation1 [shape = 'u32[144,128]{1,0:T(1,128)}', space=vmem, size = 0x12000, scoped, tag = 'internal scratch']
  #allocation2 [shape = 'f32[16,8,224]{2,1,0:T(8,128)}', space=vmem, size = 0x20000, scoped, tag = 'scratch operand']
  #allocation3 [shape = 'f32[10,8,112]{2,1,0:T(8,128)}', space=vmem, size = 0xa000, scoped, tag = 'scratch operand']
  %s0 = inlined_call_operand.vmem [shape: f32[30,8,28], index: 0, kind: input, shape index: {}]
  %s1 = inlined_call_operand.vmem [shape: f32[3,28,224], index: 1, kind: input, shape index: {}]
  %s2 = inlined_call_operand.vmem [shape: f32[1,224], index: 2, kind: input, shape index: {}]
  %s3 = inlined_call_operand.vmem [shape: f32[3,224,112], index: 3, kind: input, shape index: {}]
  %s4 = inlined_call_operand.vmem [shape: f32[1,112], index: 4, kind: input, shape index: {}]
  %s5 = inlined_call_operand.vmem [shape: f32[3,112,64], index: 5, kind: input, shape index: {}]
  %s6 = inlined_call_operand.vmem [shape: f32[1,64], index: 6, kind: input, shape index: {}]
  %s7 = inlined_call_operand.vmem [shape: f32[64,16], index: 7, kind: input, shape index: {}]
  %s8 = inlined_call_operand.vmem [shape: f32[8,16], index: 8, kind: output, shape index: {}]
  %s9 = sld [smem:[#allocation0]]
  $region42: #{mnist_cnn_forward.1} parent=0
    _
  %s11 = ssub.s32 1, %s9
  %s12 = scalar_select 0, %s11, %s9
  // Predicated region
  $region2: #{mnist_cnn_forward.1} parent=0 // pred_check
    _
  $region3: #{mnist_cnn_forward.1} parent=0 // pred_check_branch
    %14 = sbr.rel (0) target = $region5
  $region4: #{mnist_cnn_forward.1} parent=0 // pred_region
    _
  $region5: #{mnist_cnn_forward.1} parent=0 // pred_fallthru
    _
  // Predicated region
  $region6: #{mnist_cnn_forward.1} parent=0 // pred_check
    _
  $region7: #{mnist_cnn_forward.1} parent=0 // pred_check_branch
    %16 = sbr.rel (0) target = $region9
  $region8: #{mnist_cnn_forward.1} parent=0 // pred_region
    _
  $region9: #{mnist_cnn_forward.1} parent=0 // pred_fallthru
    _
  // Predicated region
  $region10: #{mnist_cnn_forward.1} parent=0 // pred_check
    _
  $region11: #{mnist_cnn_forward.1} parent=0 // pred_check_branch
    %18 = sbr.rel (0) target = $region13
  $region12: #{mnist_cnn_forward.1} parent=0 // pred_region
    _
  $region13: #{mnist_cnn_forward.1} parent=0 // pred_fallthru
    _
  // Predicated region
  $region14: #{mnist_cnn_forward.1} parent=0 // pred_check
    _
  $region15: #{mnist_cnn_forward.1} parent=0 // pred_check_branch
    %20 = sbr.rel (0) target = $region17
  $region16: #{mnist_cnn_forward.1} parent=0 // pred_region
    _
  $region17: #{mnist_cnn_forward.1} parent=0 // pred_fallthru
    _
  // Predicated region
  $region18: #{mnist_cnn_forward.1} parent=0 // pred_check
    _
  $region19: #{mnist_cnn_forward.1} parent=0 // pred_check_branch
    %22 = sbr.rel (0) target = $region21
  $region20: #{mnist_cnn_forward.1} parent=0 // pred_region
    _
  $region21: #{mnist_cnn_forward.1} parent=0 // pred_fallthru
    _
  // Predicated region
  $region22: #{mnist_cnn_forward.1} parent=0 // pred_check
    _
  $region23: #{mnist_cnn_forward.1} parent=0 // pred_check_branch
    %24 = sbr.rel (0) target = $region25
  $region24: #{mnist_cnn_forward.1} parent=0 // pred_region
    _
  $region25: #{mnist_cnn_forward.1} parent=0 // pred_fallthru
    _
  // Predicated region
  $region26: #{mnist_cnn_forward.1} parent=0 // pred_check
    _
  $region27: #{mnist_cnn_forward.1} parent=0 // pred_check_branch
    %26 = sbr.rel (0) target = $region29
  $region28: #{mnist_cnn_forward.1} parent=0 // pred_region
    _
  $region29: #{mnist_cnn_forward.1} parent=0 // pred_fallthru
    _
  // Predicated region
  $region30: #{mnist_cnn_forward.1} parent=0 // pred_check
    _
  $region31: #{mnist_cnn_forward.1} parent=0 // pred_check_branch
    %28 = sbr.rel (0) target = $region33
  $region32: #{mnist_cnn_forward.1} parent=0 // pred_region
    _
  $region33: #{mnist_cnn_forward.1} parent=0 // pred_fallthru
    _
  %29 = vst [vmem:[#allocation2] sm:$0xff] 0.0
  %vm30 = vcmask 785408
  %31 = vst.msk [vmem:[#allocation2 + $0x8] sm:$0xff] %vm30, 0.0
  %s32 = scalar_lea.vmem [#allocation2], 240
  %33 = vst [vmem:[%s32] sm:$0xff] 0.0
  %34 = vst.msk [vmem:[%s32 + $0x8] sm:$0xff] %vm30, 0.0
  %vm35 = vcmask 916480
  %36 = vst.msk [vmem:[#allocation3] sm:$0xff] %vm35, 0.0
  %s37 = scalar_lea.vmem [#allocation3], 64
  %38 = vst.msk [vmem:[%s37] sm:$0xff] %vm35, 0.0
  %39 = vst.msk [vmem:[%s37 + $0x8] sm:$0xff] %vm35, 0.0
  %v40 = vld [vmem:[%s0] sm:$0xff]
  %v41 = vld [vmem:[%s0 + $0x10] sm:$0xff]
  %v42 = vld [vmem:[%s0 + $0x20] sm:$0xff]
  %v43 = vld [vmem:[%s0 + $0x30] sm:$0xff]
  %v44 = vld [vmem:[%s0 + $0x40] sm:$0xff]
  %v45 = vld [vmem:[%s0 + $0x50] sm:$0xff]
  %v46 = vld [vmem:[%s0 + $0x60] sm:$0xff]
  %v47 = vld [vmem:[%s0 + $0x70] sm:$0xff]
  %v48 = vld [vmem:[%s0 + $0x80] sm:$0xff]
  %v49 = vld [vmem:[%s0 + $0x90] sm:$0xff]
  %v50 = vld [vmem:[%s0 + $0xa0] sm:$0xff]
  %v51 = vld [vmem:[%s0 + $0xb0] sm:$0xff]
  %v52 = vld [vmem:[%s0 + $0xc0] sm:$0xff]
  %v53 = vld [vmem:[%s0 + $0xd0] sm:$0xff]
  %v54 = vld [vmem:[%s1] sm:$0xff]
  %v55 = vld [vmem:[%s1 + $0x8] sm:$0xff]
  %v56 = vld [vmem:[%s1 + $0x10] sm:$0xff]
  %v57 = vld [vmem:[%s1 + $0x18] sm:$0xff]
  %v58 = vld [vmem:[%s1 + $0x20] sm:$0xff]
  %v59 = vld [vmem:[%s1 + $0x28] sm:$0xff]
  %v60 = vld [vmem:[%s1 + $0x30] sm:$0xf]
  %v61 = vld [vmem:[%s1 + $0x38] sm:$0xf]
  %s62 = scalar_lea.vmem %s0, 8
  %v63 = vld [vmem:[%s62] sm:$0xff]
  %v64 = vld [vmem:[%s62 + $0x10] sm:$0xff]
  %v65 = vld [vmem:[%s62 + $0x20] sm:$0xff]
  %v66 = vld [vmem:[%s62 + $0x30] sm:$0xff]
  %v67 = vld [vmem:[%s62 + $0x40] sm:$0xff]
  %v68 = vld [vmem:[%s62 + $0x50] sm:$0xff]
  %v69 = vld [vmem:[%s62 + $0x60] sm:$0xff]
  %v70 = vld [vmem:[%s62 + $0x70] sm:$0xff]
  %v71 = vld [vmem:[%s62 + $0x80] sm:$0xff]
  %v72 = vld [vmem:[%s62 + $0x90] sm:$0xff]
  %v73 = vld [vmem:[%s62 + $0xa0] sm:$0xff]
  %v74 = vld [vmem:[%s62 + $0xb0] sm:$0xff]
  %v75 = vld [vmem:[%s62 + $0xc0] sm:$0xff]
  %v76 = vld [vmem:[%s62 + $0xd0] sm:$0xff]
  %s77 = scalar_lea.vmem %s1, 64
  %v78 = vld [vmem:[%s77] sm:$0xff]
  %v79 = vld [vmem:[%s77 + $0x8] sm:$0xff]
  %v80 = vld [vmem:[%s77 + $0x10] sm:$0xff]
  %v81 = vld [vmem:[%s77 + $0x18] sm:$0xff]
  %v82 = vld [vmem:[%s77 + $0x20] sm:$0xff]
  %v83 = vld [vmem:[%s77 + $0x28] sm:$0xff]
  %v84 = vld [vmem:[%s77 + $0x30] sm:$0xf]
  %v85 = vld [vmem:[%s77 + $0x38] sm:$0xf]
  %vm86 = vcmask 228352
  %v88 = vsel %vm86, %v63, 0
  %v91 = vsel %vm86, %v64, 0
  %v94 = vsel %vm86, %v65, 0
  %v97 = vsel %vm86, %v66, 0
  %v100 = vsel %vm86, %v67, 0
  %v103 = vsel %vm86, %v68, 0
  %v106 = vsel %vm86, %v69, 0
  %v109 = vsel %vm86, %v70, 0
  %v112 = vsel %vm86, %v71, 0
  %v115 = vsel %vm86, %v72, 0
  %v118 = vsel %vm86, %v73, 0
  %v121 = vsel %vm86, %v74, 0
  %v124 = vsel %vm86, %v75, 0
  %v127 = vsel %vm86, %v76, 0
  %vm129 = vcmask 1043456
  %v131 = vsel %vm129, %v84, 0
  %v134 = vsel %vm129, %v85, 0
  %136 = vmatprep.subr.mxu0 %v79
  %137 = vmatpush1.msra.mxu0 %v78
  %138 = vmatprep.subr.mxu0 %v81
  %139 = vmatpush1.msra.mxu0 %v80
  %140 = vmatprep.subr.mxu0 %v83
  %141 = vmatpush1.msra.mxu0 %v82
  %142 = vmatprep.subr.mxu0 %v134
  %143 = vmatpush1.msra.mxu0 %v131
  %144 = vmatprep.subr.mxu0 0.0
  %145 = vmatpush1.msra.mxu0 0.0
  %146 = vmatprep.subr.mxu0 0.0
  %147 = vmatpush1.msra.mxu0 0.0
  %148 = vmatprep.subr.mxu0 0.0
  %149 = vmatpush1.msra.mxu0 0.0
  %150 = vmatprep.subr.mxu0 0.0
  %151 = vmatpush1.msra.mxu0 0.0
  %152 = vmatprep.subr.mxu0 0.0
  %153 = vmatpush1.msra.mxu0 0.0
  %154 = vmatprep.subr.mxu0 0.0
  %155 = vmatpush1.msra.mxu0 0.0
  %156 = vmatprep.subr.mxu0 0.0
  %157 = vmatpush1.msra.mxu0 0.0
  %158 = vmatprep.subr.mxu0 0.0
  %159 = vmatpush1.msra.mxu0 0.0
  %160 = vmatprep.subr.mxu0 0.0
  %161 = vmatpush1.msra.mxu0 0.0
  %162 = vmatprep.subr.mxu0 0.0
  %163 = vmatpush1.msra.mxu0 0.0
  %164 = vmatprep.subr.mxu0 0.0
  %165 = vmatpush1.msra.mxu0 0.0
  %166 = vmatprep.subr.mxu0 0.0
  %167 = vmatpush1.msra.mxu0 0.0
  %168 = vmatprep.subr.mxu0 0.0
  %169 = vmatpush1.msra.mxu0 0.0
  %170 = vmatprep.subr.mxu0 0.0
  %171 = vmatpush1.msra.mxu0 0.0
  %172 = vmatprep.subr.mxu0 0.0
  %173 = vmatpush1.msra.mxu0 0.0
  %174 = vmatprep.subr.mxu0 0.0
  %175 = vmatpush1.msra.mxu0 0.0
  %176 = vmatprep.subr.mxu0 0.0
  %177 = vmatpush1.msra.mxu0 0.0
  %178 = vmatprep.subr.mxu0 0.0
  %179 = vmatpush1.msra.mxu0 0.0
  %180 = vmatprep.subr.mxu0 0.0
  %181 = vmatpush1.msra.mxu0 0.0
  %182 = vmatprep.subr.mxu0 0.0
  %183 = vmatpush1.msra.mxu0 0.0
  %184 = vmatprep.subr.mxu0 0.0
  %185 = vmatpush1.msra.mxu0 0.0
  %186 = vmatprep.subr.mxu0 0.0
  %187 = vmatpush1.msra.mxu0 0.0
  %188 = vmatprep.subr.mxu0 0.0
  %189 = vmatpush1.msra.mxu0 0.0
  %190 = vmatprep.subr.mxu0 0.0
  %191 = vmatpush1.msra.mxu0 0.0
  %192 = vmatprep.subr.mxu0 0.0
  %193 = vmatpush1.msra.mxu0 0.0
  %194 = vmatprep.subr.mxu0 0.0
  %195 = vmatpush1.msra.mxu0 0.0
  %196 = vmatprep.subr.mxu0 0.0
  %197 = vmatpush1.msra.mxu0 0.0
  %198 = vmatprep.subr.mxu0 0.0
  %199 = vmatpush1.msra.mxu0 0.0
  %200 = vmatprep.mubr.f32.mxu0 0.0
  %201 = vmatmul.mubr.f32.gmra.mrb[0].mxu0 %v88
  %v202 = vpop.f32.mrb[0].mxu0
  %v203 = vadd.f32 0.0, %v202
  %v204 = vpop.f32.mrb[0].mxu0
  %v205 = vadd.f32 0.0, %v204
  %206 = vmatprep.mubr.f32.mxu0 0.0
  %207 = vmatmul.mubr.f32.gmra.mrb[0].mxu0 %v91
  %v208 = vpop.f32.mrb[0].mxu0
  %v209 = vadd.f32 0.0, %v208
  %v210 = vpop.f32.mrb[0].mxu0
  %v211 = vadd.f32 0.0, %v210
  %212 = vmatprep.mubr.f32.mxu0 0.0
  %213 = vmatmul.mubr.f32.gmra.mrb[0].mxu0 %v94
  %v214 = vpop.f32.mrb[0].mxu0
  %v215 = vadd.f32 0.0, %v214
  %v216 = vpop.f32.mrb[0].mxu0
  %v217 = vadd.f32 0.0, %v216
  %218 = vmatprep.mubr.f32.mxu0 0.0
  %219 = vmatmul.mubr.f32.gmra.mrb[0].mxu0 %v97
  %v220 = vpop.f32.mrb[0].mxu0
  %v221 = vadd.f32 0.0, %v220
  %v222 = vpop.f32.mrb[0].mxu0
  %v223 = vadd.f32 0.0, %v222
  %224 = vmatprep.mubr.f32.mxu0 0.0
  %225 = vmatmul.mubr.f32.gmra.mrb[0].mxu0 %v100
  %v226 = vpop.f32.mrb[0].mxu0
  %v227 = vadd.f32 0.0, %v226
  %v228 = vpop.f32.mrb[0].mxu0
  %v229 = vadd.f32 0.0, %v228
  %230 = vmatprep.mubr.f32.mxu0 0.0
  %231 = vmatmul.mubr.f32.gmra.mrb[0].mxu0 %v103
  %v232 = vpop.f32.mrb[0].mxu0
  %v233 = vadd.f32 0.0, %v232
  %v234 = vpop.f32.mrb[0].mxu0
  %v235 = vadd.f32 0.0, %v234
  %236 = vmatprep.mubr.f32.mxu0 0.0
  %237 = vmatmul.mubr.f32.gmra.mrb[0].mxu0 %v106
  %v238 = vpop.f32.mrb[0].mxu0
  %v239 = vadd.f32 0.0, %v238
  %v240 = vpop.f32.mrb[0].mxu0
  %v241 = vadd.f32 0.0, %v240
  %242 = vmatprep.mubr.f32.mxu0 0.0
  %243 = vmatmul.mubr.f32.gmra.mrb[0].mxu0 %v109
  %v244 = vpop.f32.mrb[0].mxu0
  %v245 = vadd.f32 0.0, %v244
  %v246 = vpop.f32.mrb[0].mxu0
  %v247 = vadd.f32 0.0, %v246
  %248 = vmatprep.mubr.f32.mxu0 0.0
  %249 = vmatmul.mubr.f32.gmra.mrb[0].mxu0 %v112
  %v250 = vpop.f32.mrb[0].mxu0
  %v251 = vadd.f32 0.0, %v250
  %v252 = vpop.f32.mrb[0].mxu0
  %v253 = vadd.f32 0.0, %v252
  %254 = vmatprep.mubr.f32.mxu0 0.0
  %255 = vmatmul.mubr.f32.gmra.mrb[0].mxu0 %v115
  %v256 = vpop.f32.mrb[0].mxu0
  %v257 = vadd.f32 0.0, %v256
  %v258 = vpop.f32.mrb[0].mxu0
  %v259 = vadd.f32 0.0, %v258
  %260 = vmatprep.mubr.f32.mxu0 0.0
  %261 = vmatmul.mubr.f32.gmra.mrb[0].mxu0 %v118
  %v262 = vpop.f32.mrb[0].mxu0
  %v263 = vadd.f32 0.0, %v262
  %v264 = vpop.f32.mrb[0].mxu0
  %v265 = vadd.f32 0.0, %v264
  %266 = vmatprep.mubr.f32.mxu0 0.0
  %267 = vmatmul.mubr.f32.gmra.mrb[0].mxu0 %v121
  %v268 = vpop.f32.mrb[0].mxu0
  %v269 = vadd.f32 0.0, %v268
  %v270 = vpop.f32.mrb[0].mxu0
  %v271 = vadd.f32 0.0, %v270
  %272 = vmatprep.mubr.f32.mxu0 0.0
  %273 = vmatmul.mubr.f32.gmra.mrb[0].mxu0 %v124
  %v274 = vpop.f32.mrb[0].mxu0
  %v275 = vadd.f32 0.0, %v274
  %v276 = vpop.f32.mrb[0].mxu0
  %v277 = vadd.f32 0.0, %v276
  %278 = vmatprep.mubr.f32.mxu0 0.0
  %279 = vmatmul.mubr.f32.gmra.mrb[0].mxu0 %v127
  %v280 = vpop.f32.mrb[0].mxu0
  %v281 = vadd.f32 0.0, %v280
  %v282 = vpop.f32.mrb[0].mxu0
  %v283 = vadd.f32 0.0, %v282
  %284 = vdwg.mxu0
  %v286 = vsel %vm86, %v40, 0
  %v289 = vsel %vm86, %v41, 0
  %v292 = vsel %vm86, %v42, 0
  %v295 = vsel %vm86, %v43, 0
  %v298 = vsel %vm86, %v44, 0
  %v301 = vsel %vm86, %v45, 0
  %v304 = vsel %vm86, %v46, 0
  %v307 = vsel %vm86, %v47, 0
  %v310 = vsel %vm86, %v48, 0
  %v313 = vsel %vm86, %v49, 0
  %v316 = vsel %vm86, %v50, 0
  %v319 = vsel %vm86, %v51, 0
  %v322 = vsel %vm86, %v52, 0
  %v325 = vsel %vm86, %v53, 0
  %v328 = vsel %vm129, %v60, 0
  %v331 = vsel %vm129, %v61, 0
  %333 = vmatprep.subr.mxu0 %v55
  %334 = vmatpush1.msra.mxu0 %v54
  %335 = vmatprep.subr.mxu0 %v57
  %336 = vmatpush1.msra.mxu0 %v56
  %337 = vmatprep.subr.mxu0 %v59
  %338 = vmatpush1.msra.mxu0 %v58
  %339 = vmatprep.subr.mxu0 %v331
  %340 = vmatpush1.msra.mxu0 %v328
  %341 = vmatprep.subr.mxu0 0.0
  %342 = vmatpush1.msra.mxu0 0.0
  %343 = vmatprep.subr.mxu0 0.0
  %344 = vmatpush1.msra.mxu0 0.0
  %345 = vmatprep.subr.mxu0 0.0
  %346 = vmatpush1.msra.mxu0 0.0
  %347 = vmatprep.subr.mxu0 0.0
  %348 = vmatpush1.msra.mxu0 0.0
  %349 = vmatprep.subr.mxu0 0.0
  %350 = vmatpush1.msra.mxu0 0.0
  %351 = vmatprep.subr.mxu0 0.0
  %352 = vmatpush1.msra.mxu0 0.0
  %353 = vmatprep.subr.mxu0 0.0
  %354 = vmatpush1.msra.mxu0 0.0
  %355 = vmatprep.subr.mxu0 0.0
  %356 = vmatpush1.msra.mxu0 0.0
  %357 = vmatprep.subr.mxu0 0.0
  %358 = vmatpush1.msra.mxu0 0.0
  %359 = vmatprep.subr.mxu0 0.0
  %360 = vmatpush1.msra.mxu0 0.0
  %361 = vmatprep.subr.mxu0 0.0
  %362 = vmatpush1.msra.mxu0 0.0
  %363 = vmatprep.subr.mxu0 0.0
  %364 = vmatpush1.msra.mxu0 0.0
  %365 = vmatprep.subr.mxu0 0.0
  %366 = vmatpush1.msra.mxu0 0.0
  %367 = vmatprep.subr.mxu0 0.0
  %368 = vmatpush1.msra.mxu0 0.0
  %369 = vmatprep.subr.mxu0 0.0
  %370 = vmatpush1.msra.mxu0 0.0
  %371 = vmatprep.subr.mxu0 0.0
  %372 = vmatpush1.msra.mxu0 0.0
  %373 = vmatprep.subr.mxu0 0.0
  %374 = vmatpush1.msra.mxu0 0.0
  %375 = vmatprep.subr.mxu0 0.0
  %376 = vmatpush1.msra.mxu0 0.0
  %377 = vmatprep.subr.mxu0 0.0
  %378 = vmatpush1.msra.mxu0 0.0
  %379 = vmatprep.subr.mxu0 0.0
  %380 = vmatpush1.msra.mxu0 0.0
  %381 = vmatprep.subr.mxu0 0.0
  %382 = vmatpush1.msra.mxu0 0.0
  %383 = vmatprep.subr.mxu0 0.0
  %384 = vmatpush1.msra.mxu0 0.0
  %385 = vmatprep.subr.mxu0 0.0
  %386 = vmatpush1.msra.mxu0 0.0
  %387 = vmatprep.subr.mxu0 0.0
  %388 = vmatpush1.msra.mxu0 0.0
  %389 = vmatprep.subr.mxu0 0.0
  %390 = vmatpush1.msra.mxu0 0.0
  %391 = vmatprep.subr.mxu0 0.0
  %392 = vmatpush1.msra.mxu0 0.0
  %393 = vmatprep.subr.mxu0 0.0
  %394 = vmatpush1.msra.mxu0 0.0
  %395 = vmatprep.subr.mxu0 0.0
  %396 = vmatpush1.msra.mxu0 0.0
  %397 = vmatprep.mubr.f32.mxu0 0.0
  %398 = vmatmul.mubr.f32.gmra.mrb[0].mxu0 %v286
  %v399 = vpop.f32.mrb[0].mxu0
  %v400 = vadd.f32 %v203, %v399
  %v401 = vpop.f32.mrb[0].mxu0
  %v402 = vadd.f32 %v205, %v401
  %403 = vmatprep.mubr.f32.mxu0 0.0
  %404 = vmatmul.mubr.f32.gmra.mrb[0].mxu0 %v289
  %v405 = vpop.f32.mrb[0].mxu0
  %v406 = vadd.f32 %v209, %v405
  %v407 = vpop.f32.mrb[0].mxu0
  %v408 = vadd.f32 %v211, %v407
  %409 = vmatprep.mubr.f32.mxu0 0.0
  %410 = vmatmul.mubr.f32.gmra.mrb[0].mxu0 %v292
  %v411 = vpop.f32.mrb[0].mxu0
  %v412 = vadd.f32 %v215, %v411
  %v413 = vpop.f32.mrb[0].mxu0
  %v414 = vadd.f32 %v217, %v413
  %415 = vmatprep.mubr.f32.mxu0 0.0
  %416 = vmatmul.mubr.f32.gmra.mrb[0].mxu0 %v295
  %v417 = vpop.f32.mrb[0].mxu0
  %v418 = vadd.f32 %v221, %v417
  %v419 = vpop.f32.mrb[0].mxu0
  %v420 = vadd.f32 %v223, %v419
  %421 = vmatprep.mubr.f32.mxu0 0.0
  %422 = vmatmul.mubr.f32.gmra.mrb[0].mxu0 %v298
  %v423 = vpop.f32.mrb[0].mxu0
  %v424 = vadd.f32 %v227, %v423
  %v425 = vpop.f32.mrb[0].mxu0
  %v426 = vadd.f32 %v229, %v425
  %427 = vmatprep.mubr.f32.mxu0 0.0
  %428 = vmatmul.mubr.f32.gmra.mrb[0].mxu0 %v301
  %v429 = vpop.f32.mrb[0].mxu0
  %v430 = vadd.f32 %v233, %v429
  %v431 = vpop.f32.mrb[0].mxu0
  %v432 = vadd.f32 %v235, %v431
  %433 = vmatprep.mubr.f32.mxu0 0.0
  %434 = vmatmul.mubr.f32.gmra.mrb[0].mxu0 %v304
  %v435 = vpop.f32.mrb[0].mxu0
  %v436 = vadd.f32 %v239, %v435
  %v437 = vpop.f32.mrb[0].mxu0
  %v438 = vadd.f32 %v241, %v437
  %439 = vmatprep.mubr.f32.mxu0 0.0
  %440 = vmatmul.mubr.f32.gmra.mrb[0].mxu0 %v307
  %v441 = vpop.f32.mrb[0].mxu0
  %v442 = vadd.f32 %v245, %v441
  %v443 = vpop.f32.mrb[0].mxu0
  %v444 = vadd.f32 %v247, %v443
  %445 = vmatprep.mubr.f32.mxu0 0.0
  %446 = vmatmul.mubr.f32.gmra.mrb[0].mxu0 %v310
  %v447 = vpop.f32.mrb[0].mxu0
  %v448 = vadd.f32 %v251, %v447
  %v449 = vpop.f32.mrb[0].mxu0
  %v450 = vadd.f32 %v253, %v449
  %451 = vmatprep.mubr.f32.mxu0 0.0
  %452 = vmatmul.mubr.f32.gmra.mrb[0].mxu0 %v313
  %v453 = vpop.f32.mrb[0].mxu0
  %v454 = vadd.f32 %v257, %v453
  %v455 = vpop.f32.mrb[0].mxu0
  %v456 = vadd.f32 %v259, %v455
  %457 = vmatprep.mubr.f32.mxu0 0.0
  %458 = vmatmul.mubr.f32.gmra.mrb[0].mxu0 %v316
  %v459 = vpop.f32.mrb[0].mxu0
  %v460 = vadd.f32 %v263, %v459
  %v461 = vpop.f32.mrb[0].mxu0
  %v462 = vadd.f32 %v265, %v461
  %463 = vmatprep.mubr.f32.mxu0 0.0
  %464 = vmatmul.mubr.f32.gmra.mrb[0].mxu0 %v319
  %v465 = vpop.f32.mrb[0].mxu0
  %v466 = vadd.f32 %v269, %v465
  %v467 = vpop.f32.mrb[0].mxu0
  %v468 = vadd.f32 %v271, %v467
  %469 = vmatprep.mubr.f32.mxu0 0.0
  %470 = vmatmul.mubr.f32.gmra.mrb[0].mxu0 %v322
  %v471 = vpop.f32.mrb[0].mxu0
  %v472 = vadd.f32 %v275, %v471
  %v473 = vpop.f32.mrb[0].mxu0
  %v474 = vadd.f32 %v277, %v473
  %475 = vmatprep.mubr.f32.mxu0 0.0
  %476 = vmatmul.mubr.f32.gmra.mrb[0].mxu0 %v325
  %v477 = vpop.f32.mrb[0].mxu0
  %v478 = vadd.f32 %v281, %v477
  %v479 = vpop.f32.mrb[0].mxu0
  %v480 = vadd.f32 %v283, %v479
  %481 = vdwg.mxu0
  %s482 = scalar_lea.vmem %s0, 16
  %v483 = vld [vmem:[%s482] sm:$0xff]
  %v484 = vld [vmem:[%s482 + $0x10] sm:$0xff]
  %v485 = vld [vmem:[%s482 + $0x20] sm:$0xff]
  %v486 = vld [vmem:[%s482 + $0x30] sm:$0xff]
  %v487 = vld [vmem:[%s482 + $0x40] sm:$0xff]
  %v488 = vld [vmem:[%s482 + $0x50] sm:$0xff]
  %v489 = vld [vmem:[%s482 + $0x60] sm:$0xff]
  %v490 = vld [vmem:[%s482 + $0x70] sm:$0xff]
  %v491 = vld [vmem:[%s482 + $0x80] sm:$0xff]
  %v492 = vld [vmem:[%s482 + $0x90] sm:$0xff]
  %v493 = vld [vmem:[%s482 + $0xa0] sm:$0xff]
  %v494 = vld [vmem:[%s482 + $0xb0] sm:$0xff]
  %v495 = vld [vmem:[%s482 + $0xc0] sm:$0xff]
  %v496 = vld [vmem:[%s482 + $0xd0] sm:$0xff]
  %s497 = scalar_lea.vmem %s1, 128
  %v498 = vld [vmem:[%s497] sm:$0xff]
  %v499 = vld [vmem:[%s497 + $0x8] sm:$0xff]
  %v500 = vld [vmem:[%s497 + $0x10] sm:$0xff]
  %v501 = vld [vmem:[%s497 + $0x18] sm:$0xff]
  %v502 = vld [vmem:[%s497 + $0x20] sm:$0xff]
  %v503 = vld [vmem:[%s497 + $0x28] sm:$0xff]
  %v504 = vld [vmem:[%s497 + $0x30] sm:$0xf]
  %v505 = vld [vmem:[%s497 + $0x38] sm:$0xf]
  %v507 = vsel %vm86, %v483, 0
  %v510 = vsel %vm86, %v484, 0
  %v513 = vsel %vm86, %v485, 0
  %v516 = vsel %vm86, %v486, 0
  %v519 = vsel %vm86, %v487, 0
  %v522 = vsel %vm86, %v488, 0
  %v525 = vsel %vm86, %v489, 0
  %v528 = vsel %vm86, %v490, 0
  %v531 = vsel %vm86, %v491, 0
  %v534 = vsel %vm86, %v492, 0
  %v537 = vsel %vm86, %v493, 0
  %v540 = vsel %vm86, %v494, 0
  %v543 = vsel %vm86, %v495, 0
  %v546 = vsel %vm86, %v496, 0
  %v549 = vsel %vm129, %v504, 0
  %v552 = vsel %vm129, %v505, 0
  %554 = vmatprep.subr.mxu0 %v499
  %555 = vmatpush1.msra.mxu0 %v498
  %556 = vmatprep.subr.mxu0 %v501
  %557 = vmatpush1.msra.mxu0 %v500
  %558 = vmatprep.subr.mxu0 %v503
  %559 = vmatpush1.msra.mxu0 %v502
  %560 = vmatprep.subr.mxu0 %v552
  %561 = vmatpush1.msra.mxu0 %v549
  %562 = vmatprep.subr.mxu0 0.0
  %563 = vmatpush1.msra.mxu0 0.0
  %564 = vmatprep.subr.mxu0 0.0
  %565 = vmatpush1.msra.mxu0 0.0
  %566 = vmatprep.subr.mxu0 0.0
  %567 = vmatpush1.msra.mxu0 0.0
  %568 = vmatprep.subr.mxu0 0.0
  %569 = vmatpush1.msra.mxu0 0.0
  %570 = vmatprep.subr.mxu0 0.0
  %571 = vmatpush1.msra.mxu0 0.0
  %572 = vmatprep.subr.mxu0 0.0
  %573 = vmatpush1.msra.mxu0 0.0
  %574 = vmatprep.subr.mxu0 0.0
  %575 = vmatpush1.msra.mxu0 0.0
  %576 = vmatprep.subr.mxu0 0.0
  %577 = vmatpush1.msra.mxu0 0.0
  %578 = vmatprep.subr.mxu0 0.0
  %579 = vmatpush1.msra.mxu0 0.0
  %580 = vmatprep.subr.mxu0 0.0
  %581 = vmatpush1.msra.mxu0 0.0
  %582 = vmatprep.subr.mxu0 0.0
  %583 = vmatpush1.msra.mxu0 0.0
  %584 = vmatprep.subr.mxu0 0.0
  %585 = vmatpush1.msra.mxu0 0.0
  %586 = vmatprep.subr.mxu0 0.0
  %587 = vmatpush1.msra.mxu0 0.0
  %588 = vmatprep.subr.mxu0 0.0
  %589 = vmatpush1.msra.mxu0 0.0
  %590 = vmatprep.subr.mxu0 0.0
  %591 = vmatpush1.msra.mxu0 0.0
  %592 = vmatprep.subr.mxu0 0.0
  %593 = vmatpush1.msra.mxu0 0.0
  %594 = vmatprep.subr.mxu0 0.0
  %595 = vmatpush1.msra.mxu0 0.0
  %596 = vmatprep.subr.mxu0 0.0
  %597 = vmatpush1.msra.mxu0 0.0
  %598 = vmatprep.subr.mxu0 0.0
  %599 = vmatpush1.msra.mxu0 0.0
  %600 = vmatprep.subr.mxu0 0.0
  %601 = vmatpush1.msra.mxu0 0.0
  %602 = vmatprep.subr.mxu0 0.0
  %603 = vmatpush1.msra.mxu0 0.0
  %604 = vmatprep.subr.mxu0 0.0
  %605 = vmatpush1.msra.mxu0 0.0
  %606 = vmatprep.subr.mxu0 0.0
  %607 = vmatpush1.msra.mxu0 0.0
  %608 = vmatprep.subr.mxu0 0.0
  %609 = vmatpush1.msra.mxu0 0.0
  %610 = vmatprep.subr.mxu0 0.0
  %611 = vmatpush1.msra.mxu0 0.0
  %612 = vmatprep.subr.mxu0 0.0
  %613 = vmatpush1.msra.mxu0 0.0
  %614 = vmatprep.subr.mxu0 0.0
  %615 = vmatpush1.msra.mxu0 0.0
  %616 = vmatprep.subr.mxu0 0.0
  %617 = vmatpush1.msra.mxu0 0.0
  %618 = vmatprep.mubr.f32.mxu0 0.0
  %619 = vmatmul.mubr.f32.gmra.mrb[0].mxu0 %v507
  %v620 = vpop.f32.mrb[0].mxu0
  %v621 = vadd.f32 0.0, %v620
  %v622 = vpop.f32.mrb[0].mxu0
  %v623 = vadd.f32 0.0, %v622
  %624 = vmatprep.mubr.f32.mxu0 0.0
  %625 = vmatmul.mubr.f32.gmra.mrb[0].mxu0 %v510
  %v626 = vpop.f32.mrb[0].mxu0
  %v627 = vadd.f32 0.0, %v626
  %v628 = vpop.f32.mrb[0].mxu0
  %v629 = vadd.f32 0.0, %v628
  %630 = vmatprep.mubr.f32.mxu0 0.0
  %631 = vmatmul.mubr.f32.gmra.mrb[0].mxu0 %v513
  %v632 = vpop.f32.mrb[0].mxu0
  %v633 = vadd.f32 0.0, %v632
  %v634 = vpop.f32.mrb[0].mxu0
  %v635 = vadd.f32 0.0, %v634
  %636 = vmatprep.mubr.f32.mxu0 0.0
  %637 = vmatmul.mubr.f32.gmra.mrb[0].mxu0 %v516
  %v638 = vpop.f32.mrb[0].mxu0
  %v639 = vadd.f32 0.0, %v638
  %v640 = vpop.f32.mrb[0].mxu0
  %v641 = vadd.f32 0.0, %v640
  %642 = vmatprep.mubr.f32.mxu0 0.0
  %643 = vmatmul.mubr.f32.gmra.mrb[0].mxu0 %v519
  %v644 = vpop.f32.mrb[0].mxu0
  %v645 = vadd.f32 0.0, %v644
  %v646 = vpop.f32.mrb[0].mxu0
  %v647 = vadd.f32 0.0, %v646
  %648 = vmatprep.mubr.f32.mxu0 0.0
  %649 = vmatmul.mubr.f32.gmra.mrb[0].mxu0 %v522
  %v650 = vpop.f32.mrb[0].mxu0
  %v651 = vadd.f32 0.0, %v650
  %v652 = vpop.f32.mrb[0].mxu0
  %v653 = vadd.f32 0.0, %v652
  %654 = vmatprep.mubr.f32.mxu0 0.0
  %655 = vmatmul.mubr.f32.gmra.mrb[0].mxu0 %v525
  %v656 = vpop.f32.mrb[0].mxu0
  %v657 = vadd.f32 0.0, %v656
  %v658 = vpop.f32.mrb[0].mxu0
  %v659 = vadd.f32 0.0, %v658
  %660 = vmatprep.mubr.f32.mxu0 0.0
  %661 = vmatmul.mubr.f32.gmra.mrb[0].mxu0 %v528
  %v662 = vpop.f32.mrb[0].mxu0
  %v663 = vadd.f32 0.0, %v662
  %v664 = vpop.f32.mrb[0].mxu0
  %v665 = vadd.f32 0.0, %v664
  %666 = vmatprep.mubr.f32.mxu0 0.0
  %667 = vmatmul.mubr.f32.gmra.mrb[0].mxu0 %v531
  %v668 = vpop.f32.mrb[0].mxu0
  %v669 = vadd.f32 0.0, %v668
  %v670 = vpop.f32.mrb[0].mxu0
  %v671 = vadd.f32 0.0, %v670
  %672 = vmatprep.mubr.f32.mxu0 0.0
  %673 = vmatmul.mubr.f32.gmra.mrb[0].mxu0 %v534
  %v674 = vpop.f32.mrb[0].mxu0
  %v675 = vadd.f32 0.0, %v674
  %v676 = vpop.f32.mrb[0].mxu0
  %v677 = vadd.f32 0.0, %v676
  %678 = vmatprep.mubr.f32.mxu0 0.0
  %679 = vmatmul.mubr.f32.gmra.mrb[0].mxu0 %v537
  %v680 = vpop.f32.mrb[0].mxu0
  %v681 = vadd.f32 0.0, %v680
  %v682 = vpop.f32.mrb[0].mxu0
  %v683 = vadd.f32 0.0, %v682
  %684 = vmatprep.mubr.f32.mxu0 0.0
  %685 = vmatmul.mubr.f32.gmra.mrb[0].mxu0 %v540
  %v686 = vpop.f32.mrb[0].mxu0
  %v687 = vadd.f32 0.0, %v686
  %v688 = vpop.f32.mrb[0].mxu0
  %v689 = vadd.f32 0.0, %v688
  %690 = vmatprep.mubr.f32.mxu0 0.0
  %691 = vmatmul.mubr.f32.gmra.mrb[0].mxu0 %v543
  %v692 = vpop.f32.mrb[0].mxu0
  %v693 = vadd.f32 0.0, %v692
  %v694 = vpop.f32.mrb[0].mxu0
  %v695 = vadd.f32 0.0, %v694
  %696 = vmatprep.mubr.f32.mxu0 0.0
  %697 = vmatmul.mubr.f32.gmra.mrb[0].mxu0 %v546
  %v698 = vpop.f32.mrb[0].mxu0
  %v699 = vadd.f32 0.0, %v698
  %v700 = vpop.f32.mrb[0].mxu0
  %v701 = vadd.f32 0.0, %v700
  %702 = vdwg.mxu0
  %v703 = vadd.f32 %v400, %v621
  %v704 = vadd.f32 %v402, %v623
  %v705 = vadd.f32 %v406, %v627
  %v706 = vadd.f32 %v408, %v629
  %v707 = vadd.f32 %v412, %v633
  %v708 = vadd.f32 %v414, %v635
  %v709 = vadd.f32 %v418, %v639
  %v710 = vadd.f32 %v420, %v641
  %v711 = vadd.f32 %v424, %v645
  %v712 = vadd.f32 %v426, %v647
  %v713 = vadd.f32 %v430, %v651
  %v714 = vadd.f32 %v432, %v653
  %v715 = vadd.f32 %v436, %v657
  %v716 = vadd.f32 %v438, %v659
  %v717 = vadd.f32 %v442, %v663
  %v718 = vadd.f32 %v444, %v665
  %v719 = vadd.f32 %v448, %v669
  %v720 = vadd.f32 %v450, %v671
  %v721 = vadd.f32 %v454, %v675
  %v722 = vadd.f32 %v456, %v677
  %v723 = vadd.f32 %v460, %v681
  %v724 = vadd.f32 %v462, %v683
  %v725 = vadd.f32 %v466, %v687
  %v726 = vadd.f32 %v468, %v689
  %v727 = vadd.f32 %v472, %v693
  %v728 = vadd.f32 %v474, %v695
  %v729 = vadd.f32 %v478, %v699
  %v730 = vadd.f32 %v480, %v701
  %v731 = vld [vmem:[%s2] sm:$0x3]
  %v733 = vlaneseq
  %v734 = vshrl.u32 %v733, 7
  %v735 = vsub.s32 0, %v734
  %v736 = vrot.slane %v731, %v735
  %v737 = vlaneseq
  %v738 = vshrl.u32 %v737, 7
  %v739 = vsub.s32 1, %v738
  %v740 = vrot.slane %v731, %v739
  %v743 = vadd.f32 %v703, %v736
  %v744 = vadd.f32 %v704, %v740
  %v745 = vadd.f32 %v705, %v736
  %v746 = vadd.f32 %v706, %v740
  %v747 = vadd.f32 %v707, %v736
  %v748 = vadd.f32 %v708, %v740
  %v749 = vadd.f32 %v709, %v736
  %v750 = vadd.f32 %v710, %v740
  %v751 = vadd.f32 %v711, %v736
  %v752 = vadd.f32 %v712, %v740
  %v753 = vadd.f32 %v713, %v736
  %v754 = vadd.f32 %v714, %v740
  %v755 = vadd.f32 %v715, %v736
  %v756 = vadd.f32 %v716, %v740
  %v757 = vadd.f32 %v717, %v736
  %v758 = vadd.f32 %v718, %v740
  %v759 = vadd.f32 %v719, %v736
  %v760 = vadd.f32 %v720, %v740
  %v761 = vadd.f32 %v721, %v736
  %v762 = vadd.f32 %v722, %v740
  %v763 = vadd.f32 %v723, %v736
  %v764 = vadd.f32 %v724, %v740
  %v765 = vadd.f32 %v725, %v736
  %v766 = vadd.f32 %v726, %v740
  %v767 = vadd.f32 %v727, %v736
  %v768 = vadd.f32 %v728, %v740
  %v769 = vadd.f32 %v729, %v736
  %v770 = vadd.f32 %v730, %v740
  %v771 = vmax.f32 %v743, 0.0
  %v772 = vmax.f32 %v744, 0.0
  %v773 = vmax.f32 %v745, 0.0
  %v774 = vmax.f32 %v746, 0.0
  %v775 = vmax.f32 %v747, 0.0
  %v776 = vmax.f32 %v748, 0.0
  %v777 = vmax.f32 %v749, 0.0
  %v778 = vmax.f32 %v750, 0.0
  %v779 = vmax.f32 %v751, 0.0
  %v780 = vmax.f32 %v752, 0.0
  %v781 = vmax.f32 %v753, 0.0
  %v782 = vmax.f32 %v754, 0.0
  %v783 = vmax.f32 %v755, 0.0
  %v784 = vmax.f32 %v756, 0.0
  %v785 = vmax.f32 %v757, 0.0
  %v786 = vmax.f32 %v758, 0.0
  %v787 = vmax.f32 %v759, 0.0
  %v788 = vmax.f32 %v760, 0.0
  %v789 = vmax.f32 %v761, 0.0
  %v790 = vmax.f32 %v762, 0.0
  %v791 = vmax.f32 %v763, 0.0
  %v792 = vmax.f32 %v764, 0.0
  %v793 = vmax.f32 %v765, 0.0
  %v794 = vmax.f32 %v766, 0.0
  %v795 = vmax.f32 %v767, 0.0
  %v796 = vmax.f32 %v768, 0.0
  %v797 = vmax.f32 %v769, 0.0
  %v798 = vmax.f32 %v770, 0.0
  %s799 = scalar_lea.vmem [#allocation2], 16
  %800 = vst [vmem:[%s799] sm:$0xff] %v771
  %801 = vst.msk [vmem:[%s799 + $0x8] sm:$0xff] %vm30, %v772
  %802 = vst [vmem:[%s799 + $0x10] sm:$0xff] %v773
  %803 = vst.msk [vmem:[%s799 + $0x18] sm:$0xff] %vm30, %v774
  %804 = vst [vmem:[%s799 + $0x20] sm:$0xff] %v775
  %805 = vst.msk [vmem:[%s799 + $0x28] sm:$0xff] %vm30, %v776
  %806 = vst [vmem:[%s799 + $0x30] sm:$0xff] %v777
  %807 = vst.msk [vmem:[%s799 + $0x38] sm:$0xff] %vm30, %v778
  %808 = vst [vmem:[%s799 + $0x40] sm:$0xff] %v779
  %809 = vst.msk [vmem:[%s799 + $0x48] sm:$0xff] %vm30, %v780
  %810 = vst [vmem:[%s799 + $0x50] sm:$0xff] %v781
  %811 = vst.msk [vmem:[%s799 + $0x58] sm:$0xff] %vm30, %v782
  %812 = vst [vmem:[%s799 + $0x60] sm:$0xff] %v783
  %813 = vst.msk [vmem:[%s799 + $0x68] sm:$0xff] %vm30, %v784
  %814 = vst [vmem:[%s799 + $0x70] sm:$0xff] %v785
  %815 = vst.msk [vmem:[%s799 + $0x78] sm:$0xff] %vm30, %v786
  %816 = vst [vmem:[%s799 + $0x80] sm:$0xff] %v787
  %817 = vst.msk [vmem:[%s799 + $0x88] sm:$0xff] %vm30, %v788
  %818 = vst [vmem:[%s799 + $0x90] sm:$0xff] %v789
  %819 = vst.msk [vmem:[%s799 + $0x98] sm:$0xff] %vm30, %v790
  %820 = vst [vmem:[%s799 + $0xa0] sm:$0xff] %v791
  %821 = vst.msk [vmem:[%s799 + $0xa8] sm:$0xff] %vm30, %v792
  %822 = vst [vmem:[%s799 + $0xb0] sm:$0xff] %v793
  %823 = vst.msk [vmem:[%s799 + $0xb8] sm:$0xff] %vm30, %v794
  %824 = vst [vmem:[%s799 + $0xc0] sm:$0xff] %v795
  %825 = vst.msk [vmem:[%s799 + $0xc8] sm:$0xff] %vm30, %v796
  %826 = vst [vmem:[%s799 + $0xd0] sm:$0xff] %v797
  %827 = vst.msk [vmem:[%s799 + $0xd8] sm:$0xff] %vm30, %v798
  %v828 = vld [vmem:[#allocation2] sm:$0xff]
  %v829 = vld [vmem:[#allocation2 + $0x8] sm:$0xff]
  %v830 = vld [vmem:[#allocation2 + $0x20] sm:$0xff]
  %v831 = vld [vmem:[#allocation2 + $0x28] sm:$0xff]
  %v832 = vld [vmem:[#allocation2 + $0x40] sm:$0xff]
  %v833 = vld [vmem:[#allocation2 + $0x48] sm:$0xff]
  %v834 = vld [vmem:[#allocation2 + $0x60] sm:$0xff]
  %v835 = vld [vmem:[#allocation2 + $0x68] sm:$0xff]
  %v836 = vld [vmem:[#allocation2 + $0x80] sm:$0xff]
  %v837 = vld [vmem:[#allocation2 + $0x88] sm:$0xff]
  %v838 = vld [vmem:[#allocation2 + $0xa0] sm:$0xff]
  %v839 = vld [vmem:[#allocation2 + $0xa8] sm:$0xff]
  %v840 = vld [vmem:[#allocation2 + $0xc0] sm:$0xff]
  %v841 = vld [vmem:[#allocation2 + $0xc8] sm:$0xff]
  %v842 = vld [vmem:[%s3] sm:$0xff]
  %v843 = vld [vmem:[%s3 + $0x8] sm:$0xff]
  %v844 = vld [vmem:[%s3 + $0x10] sm:$0xff]
  %v845 = vld [vmem:[%s3 + $0x18] sm:$0xff]
  %v846 = vld [vmem:[%s3 + $0x20] sm:$0xff]
  %v847 = vld [vmem:[%s3 + $0x28] sm:$0xff]
  %v848 = vld [vmem:[%s3 + $0x30] sm:$0xff]
  %v849 = vld [vmem:[%s3 + $0x38] sm:$0xff]
  %v850 = vld [vmem:[%s3 + $0x40] sm:$0xff]
  %v851 = vld [vmem:[%s3 + $0x48] sm:$0xff]
  %v852 = vld [vmem:[%s3 + $0x50] sm:$0xff]
  %v853 = vld [vmem:[%s3 + $0x58] sm:$0xff]
  %v854 = vld [vmem:[%s3 + $0x60] sm:$0xff]
  %v855 = vld [vmem:[%s3 + $0x68] sm:$0xff]
  %v856 = vld [vmem:[%s3 + $0x70] sm:$0xff]
  %v857 = vld [vmem:[%s3 + $0x78] sm:$0xff]
  %v858 = vld [vmem:[%s3 + $0x80] sm:$0xff]
  %v859 = vld [vmem:[%s3 + $0x88] sm:$0xff]
  %v860 = vld [vmem:[%s3 + $0x90] sm:$0xff]
  %v861 = vld [vmem:[%s3 + $0x98] sm:$0xff]
  %v862 = vld [vmem:[%s3 + $0xa0] sm:$0xff]
  %v863 = vld [vmem:[%s3 + $0xa8] sm:$0xff]
  %v864 = vld [vmem:[%s3 + $0xb0] sm:$0xff]
  %v865 = vld [vmem:[%s3 + $0xb8] sm:$0xff]
  %v866 = vld [vmem:[%s3 + $0xc0] sm:$0xff]
  %v867 = vld [vmem:[%s3 + $0xc8] sm:$0xff]
  %v868 = vld [vmem:[%s3 + $0xd0] sm:$0xff]
  %v869 = vld [vmem:[%s3 + $0xd8] sm:$0xff]
  %v870 = vld [vmem:[%s799] sm:$0xff]
  %v871 = vld [vmem:[%s799 + $0x8] sm:$0xff]
  %v872 = vld [vmem:[%s799 + $0x20] sm:$0xff]
  %v873 = vld [vmem:[%s799 + $0x28] sm:$0xff]
  %v874 = vld [vmem:[%s799 + $0x40] sm:$0xff]
  %v875 = vld [vmem:[%s799 + $0x48] sm:$0xff]
  %v876 = vld [vmem:[%s799 + $0x60] sm:$0xff]
  %v877 = vld [vmem:[%s799 + $0x68] sm:$0xff]
  %v878 = vld [vmem:[%s799 + $0x80] sm:$0xff]
  %v879 = vld [vmem:[%s799 + $0x88] sm:$0xff]
  %v880 = vld [vmem:[%s799 + $0xa0] sm:$0xff]
  %v881 = vld [vmem:[%s799 + $0xa8] sm:$0xff]
  %v882 = vld [vmem:[%s799 + $0xc0] sm:$0xff]
  %v883 = vld [vmem:[%s799 + $0xc8] sm:$0xff]
  %s884 = scalar_lea.vmem %s3, 224
  %v885 = vld [vmem:[%s884] sm:$0xff]
  %v886 = vld [vmem:[%s884 + $0x8] sm:$0xff]
  %v887 = vld [vmem:[%s884 + $0x10] sm:$0xff]
  %v888 = vld [vmem:[%s884 + $0x18] sm:$0xff]
  %v889 = vld [vmem:[%s884 + $0x20] sm:$0xff]
  %v890 = vld [vmem:[%s884 + $0x28] sm:$0xff]
  %v891 = vld [vmem:[%s884 + $0x30] sm:$0xff]
  %v892 = vld [vmem:[%s884 + $0x38] sm:$0xff]
  %v893 = vld [vmem:[%s884 + $0x40] sm:$0xff]
  %v894 = vld [vmem:[%s884 + $0x48] sm:$0xff]
  %v895 = vld [vmem:[%s884 + $0x50] sm:$0xff]
  %v896 = vld [vmem:[%s884 + $0x58] sm:$0xff]
  %v897 = vld [vmem:[%s884 + $0x60] sm:$0xff]
  %v898 = vld [vmem:[%s884 + $0x68] sm:$0xff]
  %v899 = vld [vmem:[%s884 + $0x70] sm:$0xff]
  %v900 = vld [vmem:[%s884 + $0x78] sm:$0xff]
  %v901 = vld [vmem:[%s884 + $0x80] sm:$0xff]
  %v902 = vld [vmem:[%s884 + $0x88] sm:$0xff]
  %v903 = vld [vmem:[%s884 + $0x90] sm:$0xff]
  %v904 = vld [vmem:[%s884 + $0x98] sm:$0xff]
  %v905 = vld [vmem:[%s884 + $0xa0] sm:$0xff]
  %v906 = vld [vmem:[%s884 + $0xa8] sm:$0xff]
  %v907 = vld [vmem:[%s884 + $0xb0] sm:$0xff]
  %v908 = vld [vmem:[%s884 + $0xb8] sm:$0xff]
  %v909 = vld [vmem:[%s884 + $0xc0] sm:$0xff]
  %v910 = vld [vmem:[%s884 + $0xc8] sm:$0xff]
  %v911 = vld [vmem:[%s884 + $0xd0] sm:$0xff]
  %v912 = vld [vmem:[%s884 + $0xd8] sm:$0xff]
  %v914 = vsel %vm30, %v871, 0
  %v917 = vsel %vm30, %v873, 0
  %v920 = vsel %vm30, %v875, 0
  %v923 = vsel %vm30, %v877, 0
  %v926 = vsel %vm30, %v879, 0
  %v929 = vsel %vm30, %v881, 0
  %v932 = vsel %vm30, %v883, 0
  %934 = vmatprep.subr.mxu0 0.0
  %935 = vmatpush1.msra.mxu0 %v885
  %936 = vmatprep.subr.mxu0 0.0
  %937 = vmatpush1.msra.mxu0 %v886
  %938 = vmatprep.subr.mxu0 0.0
  %939 = vmatpush1.msra.mxu0 %v887
  %940 = vmatprep.subr.mxu0 0.0
  %941 = vmatpush1.msra.mxu0 %v888
  %942 = vmatprep.subr.mxu0 0.0
  %943 = vmatpush1.msra.mxu0 %v889
  %944 = vmatprep.subr.mxu0 0.0
  %945 = vmatpush1.msra.mxu0 %v890
  %946 = vmatprep.subr.mxu0 0.0
  %947 = vmatpush1.msra.mxu0 %v891
  %948 = vmatprep.subr.mxu0 0.0
  %949 = vmatpush1.msra.mxu0 %v892
  %950 = vmatprep.subr.mxu0 0.0
  %951 = vmatpush1.msra.mxu0 %v893
  %952 = vmatprep.subr.mxu0 0.0
  %953 = vmatpush1.msra.mxu0 %v894
  %954 = vmatprep.subr.mxu0 0.0
  %955 = vmatpush1.msra.mxu0 %v895
  %956 = vmatprep.subr.mxu0 0.0
  %957 = vmatpush1.msra.mxu0 %v896
  %958 = vmatprep.subr.mxu0 0.0
  %959 = vmatpush1.msra.mxu0 %v897
  %960 = vmatprep.subr.mxu0 0.0
  %961 = vmatpush1.msra.mxu0 %v898
  %962 = vmatprep.subr.mxu0 0.0
  %963 = vmatpush1.msra.mxu0 %v899
  %964 = vmatprep.subr.mxu0 0.0
  %965 = vmatpush1.msra.mxu0 %v900
  %966 = vmatprep.subr.mxu0 0.0
  %967 = vmatpush1.msra.mxu0 %v901
  %968 = vmatprep.subr.mxu0 0.0
  %969 = vmatpush1.msra.mxu0 %v902
  %970 = vmatprep.subr.mxu0 0.0
  %971 = vmatpush1.msra.mxu0 %v903
  %972 = vmatprep.subr.mxu0 0.0
  %973 = vmatpush1.msra.mxu0 %v904
  %974 = vmatprep.subr.mxu0 0.0
  %975 = vmatpush1.msra.mxu0 %v905
  %976 = vmatprep.subr.mxu0 0.0
  %977 = vmatpush1.msra.mxu0 %v906
  %978 = vmatprep.subr.mxu0 0.0
  %979 = vmatpush1.msra.mxu0 %v907
  %980 = vmatprep.subr.mxu0 0.0
  %981 = vmatpush1.msra.mxu0 %v908
  %982 = vmatprep.subr.mxu0 0.0
  %983 = vmatpush1.msra.mxu0 %v909
  %984 = vmatprep.subr.mxu0 0.0
  %985 = vmatpush1.msra.mxu0 %v910
  %986 = vmatprep.subr.mxu0 0.0
  %987 = vmatpush1.msra.mxu0 %v911
  %988 = vmatprep.subr.mxu0 0.0
  %989 = vmatpush1.msra.mxu0 %v912
  %990 = vmatprep.subr.mxu0 0.0
  %991 = vmatpush1.msra.mxu0 0.0
  %992 = vmatprep.subr.mxu0 0.0
  %993 = vmatpush1.msra.mxu0 0.0
  %994 = vmatprep.subr.mxu0 0.0
  %995 = vmatpush1.msra.mxu0 0.0
  %996 = vmatprep.subr.mxu0 0.0
  %997 = vmatpush1.msra.mxu0 0.0
  %998 = vmatprep.mubr.f32.mxu0 %v914
  %999 = vmatmul.mubr.f32.gmra.mrb[0].mxu0 %v870
  %v1000 = vpop.f32.mrb[0].mxu0
  %v1001 = vadd.f32 0.0, %v1000
  %v1002 = vpop.f32.mrb[0].mxu0
  %1003 = vmatprep.mubr.f32.mxu0 %v917
  %1004 = vmatmul.mubr.f32.gmra.mrb[0].mxu0 %v872
  %v1005 = vpop.f32.mrb[0].mxu0
  %v1006 = vadd.f32 0.0, %v1005
  %v1007 = vpop.f32.mrb[0].mxu0
  %1008 = vmatprep.mubr.f32.mxu0 %v920
  %1009 = vmatmul.mubr.f32.gmra.mrb[0].mxu0 %v874
  %v1010 = vpop.f32.mrb[0].mxu0
  %v1011 = vadd.f32 0.0, %v1010
  %v1012 = vpop.f32.mrb[0].mxu0
  %1013 = vmatprep.mubr.f32.mxu0 %v923
  %1014 = vmatmul.mubr.f32.gmra.mrb[0].mxu0 %v876
  %v1015 = vpop.f32.mrb[0].mxu0
  %v1016 = vadd.f32 0.0, %v1015
  %v1017 = vpop.f32.mrb[0].mxu0
  %1018 = vmatprep.mubr.f32.mxu0 %v926
  %1019 = vmatmul.mubr.f32.gmra.mrb[0].mxu0 %v878
  %v1020 = vpop.f32.mrb[0].mxu0
  %v1021 = vadd.f32 0.0, %v1020
  %v1022 = vpop.f32.mrb[0].mxu0
  %1023 = vmatprep.mubr.f32.mxu0 %v929
  %1024 = vmatmul.mubr.f32.gmra.mrb[0].mxu0 %v880
  %v1025 = vpop.f32.mrb[0].mxu0
  %v1026 = vadd.f32 0.0, %v1025
  %v1027 = vpop.f32.mrb[0].mxu0
  %1028 = vmatprep.mubr.f32.mxu0 %v932
  %1029 = vmatmul.mubr.f32.gmra.mrb[0].mxu0 %v882
  %v1030 = vpop.f32.mrb[0].mxu0
  %v1031 = vadd.f32 0.0, %v1030
  %v1032 = vpop.f32.mrb[0].mxu0
  %1033 = vdwg.mxu0
  %v1035 = vsel %vm30, %v829, 0
  %v1038 = vsel %vm30, %v831, 0
  %v1041 = vsel %vm30, %v833, 0
  %v1044 = vsel %vm30, %v835, 0
  %v1047 = vsel %vm30, %v837, 0
  %v1050 = vsel %vm30, %v839, 0
  %v1053 = vsel %vm30, %v841, 0
  %1055 = vmatprep.subr.mxu0 0.0
  %1056 = vmatpush1.msra.mxu0 %v842
  %1057 = vmatprep.subr.mxu0 0.0
  %1058 = vmatpush1.msra.mxu0 %v843
  %1059 = vmatprep.subr.mxu0 0.0
  %1060 = vmatpush1.msra.mxu0 %v844
  %1061 = vmatprep.subr.mxu0 0.0
  %1062 = vmatpush1.msra.mxu0 %v845
  %1063 = vmatprep.subr.mxu0 0.0
  %1064 = vmatpush1.msra.mxu0 %v846
  %1065 = vmatprep.subr.mxu0 0.0
  %1066 = vmatpush1.msra.mxu0 %v847
  %1067 = vmatprep.subr.mxu0 0.0
  %1068 = vmatpush1.msra.mxu0 %v848
  %1069 = vmatprep.subr.mxu0 0.0
  %1070 = vmatpush1.msra.mxu0 %v849
  %1071 = vmatprep.subr.mxu0 0.0
  %1072 = vmatpush1.msra.mxu0 %v850
  %1073 = vmatprep.subr.mxu0 0.0
  %1074 = vmatpush1.msra.mxu0 %v851
  %1075 = vmatprep.subr.mxu0 0.0
  %1076 = vmatpush1.msra.mxu0 %v852
  %1077 = vmatprep.subr.mxu0 0.0
  %1078 = vmatpush1.msra.mxu0 %v853
  %1079 = vmatprep.subr.mxu0 0.0
  %1080 = vmatpush1.msra.mxu0 %v854
  %1081 = vmatprep.subr.mxu0 0.0
  %1082 = vmatpush1.msra.mxu0 %v855
  %1083 = vmatprep.subr.mxu0 0.0
  %1084 = vmatpush1.msra.mxu0 %v856
  %1085 = vmatprep.subr.mxu0 0.0
  %1086 = vmatpush1.msra.mxu0 %v857
  %1087 = vmatprep.subr.mxu0 0.0
  %1088 = vmatpush1.msra.mxu0 %v858
  %1089 = vmatprep.subr.mxu0 0.0
  %1090 = vmatpush1.msra.mxu0 %v859
  %1091 = vmatprep.subr.mxu0 0.0
  %1092 = vmatpush1.msra.mxu0 %v860
  %1093 = vmatprep.subr.mxu0 0.0
  %1094 = vmatpush1.msra.mxu0 %v861
  %1095 = vmatprep.subr.mxu0 0.0
  %1096 = vmatpush1.msra.mxu0 %v862
  %1097 = vmatprep.subr.mxu0 0.0
  %1098 = vmatpush1.msra.mxu0 %v863
  %1099 = vmatprep.subr.mxu0 0.0
  %1100 = vmatpush1.msra.mxu0 %v864
  %1101 = vmatprep.subr.mxu0 0.0
  %1102 = vmatpush1.msra.mxu0 %v865
  %1103 = vmatprep.subr.mxu0 0.0
  %1104 = vmatpush1.msra.mxu0 %v866
  %1105 = vmatprep.subr.mxu0 0.0
  %1106 = vmatpush1.msra.mxu0 %v867
  %1107 = vmatprep.subr.mxu0 0.0
  %1108 = vmatpush1.msra.mxu0 %v868
  %1109 = vmatprep.subr.mxu0 0.0
  %1110 = vmatpush1.msra.mxu0 %v869
  %1111 = vmatprep.subr.mxu0 0.0
  %1112 = vmatpush1.msra.mxu0 0.0
  %1113 = vmatprep.subr.mxu0 0.0
  %1114 = vmatpush1.msra.mxu0 0.0
  %1115 = vmatprep.subr.mxu0 0.0
  %1116 = vmatpush1.msra.mxu0 0.0
  %1117 = vmatprep.subr.mxu0 0.0
  %1118 = vmatpush1.msra.mxu0 0.0
  %1119 = vmatprep.mubr.f32.mxu0 %v1035
  %1120 = vmatmul.mubr.f32.gmra.mrb[0].mxu0 %v828
  %v1121 = vpop.f32.mrb[0].mxu0
  %v1122 = vadd.f32 %v1001, %v1121
  %v1123 = vpop.f32.mrb[0].mxu0
  %1124 = vmatprep.mubr.f32.mxu0 %v1038
  %1125 = vmatmul.mubr.f32.gmra.mrb[0].mxu0 %v830
  %v1126 = vpop.f32.mrb[0].mxu0
  %v1127 = vadd.f32 %v1006, %v1126
  %v1128 = vpop.f32.mrb[0].mxu0
  %1129 = vmatprep.mubr.f32.mxu0 %v1041
  %1130 = vmatmul.mubr.f32.gmra.mrb[0].mxu0 %v832
  %v1131 = vpop.f32.mrb[0].mxu0
  %v1132 = vadd.f32 %v1011, %v1131
  %v1133 = vpop.f32.mrb[0].mxu0
  %1134 = vmatprep.mubr.f32.mxu0 %v1044
  %1135 = vmatmul.mubr.f32.gmra.mrb[0].mxu0 %v834
  %v1136 = vpop.f32.mrb[0].mxu0
  %v1137 = vadd.f32 %v1016, %v1136
  %v1138 = vpop.f32.mrb[0].mxu0
  %1139 = vmatprep.mubr.f32.mxu0 %v1047
  %1140 = vmatmul.mubr.f32.gmra.mrb[0].mxu0 %v836
  %v1141 = vpop.f32.mrb[0].mxu0
  %v1142 = vadd.f32 %v1021, %v1141
  %v1143 = vpop.f32.mrb[0].mxu0
  %1144 = vmatprep.mubr.f32.mxu0 %v1050
  %1145 = vmatmul.mubr.f32.gmra.mrb[0].mxu0 %v838
  %v1146 = vpop.f32.mrb[0].mxu0
  %v1147 = vadd.f32 %v1026, %v1146
  %v1148 = vpop.f32.mrb[0].mxu0
  %1149 = vmatprep.mubr.f32.mxu0 %v1053
  %1150 = vmatmul.mubr.f32.gmra.mrb[0].mxu0 %v840
  %v1151 = vpop.f32.mrb[0].mxu0
  %v1152 = vadd.f32 %v1031, %v1151
  %v1153 = vpop.f32.mrb[0].mxu0
  %1154 = vdwg.mxu0
  %s1155 = scalar_lea.vmem [#allocation2], 32
  %v1156 = vld [vmem:[%s1155] sm:$0xff]
  %v1157 = vld [vmem:[%s1155 + $0x8] sm:$0xff]
  %v1158 = vld [vmem:[%s1155 + $0x20] sm:$0xff]
  %v1159 = vld [vmem:[%s1155 + $0x28] sm:$0xff]
  %v1160 = vld [vmem:[%s1155 + $0x40] sm:$0xff]
  %v1161 = vld [vmem:[%s1155 + $0x48] sm:$0xff]
  %v1162 = vld [vmem:[%s1155 + $0x60] sm:$0xff]
  %v1163 = vld [vmem:[%s1155 + $0x68] sm:$0xff]
  %v1164 = vld [vmem:[%s1155 + $0x80] sm:$0xff]
  %v1165 = vld [vmem:[%s1155 + $0x88] sm:$0xff]
  %v1166 = vld [vmem:[%s1155 + $0xa0] sm:$0xff]
  %v1167 = vld [vmem:[%s1155 + $0xa8] sm:$0xff]
  %v1168 = vld [vmem:[%s1155 + $0xc0] sm:$0xff]
  %v1169 = vld [vmem:[%s1155 + $0xc8] sm:$0xff]
  %s1170 = scalar_lea.vmem %s3, 448
  %v1171 = vld [vmem:[%s1170] sm:$0xff]
  %v1172 = vld [vmem:[%s1170 + $0x8] sm:$0xff]
  %v1173 = vld [vmem:[%s1170 + $0x10] sm:$0xff]
  %v1174 = vld [vmem:[%s1170 + $0x18] sm:$0xff]
  %v1175 = vld [vmem:[%s1170 + $0x20] sm:$0xff]
  %v1176 = vld [vmem:[%s1170 + $0x28] sm:$0xff]
  %v1177 = vld [vmem:[%s1170 + $0x30] sm:$0xff]
  %v1178 = vld [vmem:[%s1170 + $0x38] sm:$0xff]
  %v1179 = vld [vmem:[%s1170 + $0x40] sm:$0xff]
  %v1180 = vld [vmem:[%s1170 + $0x48] sm:$0xff]
  %v1181 = vld [vmem:[%s1170 + $0x50] sm:$0xff]
  %v1182 = vld [vmem:[%s1170 + $0x58] sm:$0xff]
  %v1183 = vld [vmem:[%s1170 + $0x60] sm:$0xff]
  %v1184 = vld [vmem:[%s1170 + $0x68] sm:$0xff]
  %v1185 = vld [vmem:[%s1170 + $0x70] sm:$0xff]
  %v1186 = vld [vmem:[%s1170 + $0x78] sm:$0xff]
  %v1187 = vld [vmem:[%s1170 + $0x80] sm:$0xff]
  %v1188 = vld [vmem:[%s1170 + $0x88] sm:$0xff]
  %v1189 = vld [vmem:[%s1170 + $0x90] sm:$0xff]
  %v1190 = vld [vmem:[%s1170 + $0x98] sm:$0xff]
  %v1191 = vld [vmem:[%s1170 + $0xa0] sm:$0xff]
  %v1192 = vld [vmem:[%s1170 + $0xa8] sm:$0xff]
  %v1193 = vld [vmem:[%s1170 + $0xb0] sm:$0xff]
  %v1194 = vld [vmem:[%s1170 + $0xb8] sm:$0xff]
  %v1195 = vld [vmem:[%s1170 + $0xc0] sm:$0xff]
  %v1196 = vld [vmem:[%s1170 + $0xc8] sm:$0xff]
  %v1197 = vld [vmem:[%s1170 + $0xd0] sm:$0xff]
  %v1198 = vld [vmem:[%s1170 + $0xd8] sm:$0xff]
  %v1200 = vsel %vm30, %v1157, 0
  %v1203 = vsel %vm30, %v1159, 0
  %v1206 = vsel %vm30, %v1161, 0
  %v1209 = vsel %vm30, %v1163, 0
  %v1212 = vsel %vm30, %v1165, 0
  %v1215 = vsel %vm30, %v1167, 0
  %v1218 = vsel %vm30, %v1169, 0
  %1220 = vmatprep.subr.mxu0 0.0
  %1221 = vmatpush1.msra.mxu0 %v1171
  %1222 = vmatprep.subr.mxu0 0.0
  %1223 = vmatpush1.msra.mxu0 %v1172
  %1224 = vmatprep.subr.mxu0 0.0
  %1225 = vmatpush1.msra.mxu0 %v1173
  %1226 = vmatprep.subr.mxu0 0.0
  %1227 = vmatpush1.msra.mxu0 %v1174
  %1228 = vmatprep.subr.mxu0 0.0
  %1229 = vmatpush1.msra.mxu0 %v1175
  %1230 = vmatprep.subr.mxu0 0.0
  %1231 = vmatpush1.msra.mxu0 %v1176
  %1232 = vmatprep.subr.mxu0 0.0
  %1233 = vmatpush1.msra.mxu0 %v1177
  %1234 = vmatprep.subr.mxu0 0.0
  %1235 = vmatpush1.msra.mxu0 %v1178
  %1236 = vmatprep.subr.mxu0 0.0
  %1237 = vmatpush1.msra.mxu0 %v1179
  %1238 = vmatprep.subr.mxu0 0.0
  %1239 = vmatpush1.msra.mxu0 %v1180
  %1240 = vmatprep.subr.mxu0 0.0
  %1241 = vmatpush1.msra.mxu0 %v1181
  %1242 = vmatprep.subr.mxu0 0.0
  %1243 = vmatpush1.msra.mxu0 %v1182
  %1244 = vmatprep.subr.mxu0 0.0
  %1245 = vmatpush1.msra.mxu0 %v1183
  %1246 = vmatprep.subr.mxu0 0.0
  %1247 = vmatpush1.msra.mxu0 %v1184
  %1248 = vmatprep.subr.mxu0 0.0
  %1249 = vmatpush1.msra.mxu0 %v1185
  %1250 = vmatprep.subr.mxu0 0.0
  %1251 = vmatpush1.msra.mxu0 %v1186
  %1252 = vmatprep.subr.mxu0 0.0
  %1253 = vmatpush1.msra.mxu0 %v1187
  %1254 = vmatprep.subr.mxu0 0.0
  %1255 = vmatpush1.msra.mxu0 %v1188
  %1256 = vmatprep.subr.mxu0 0.0
  %1257 = vmatpush1.msra.mxu0 %v1189
  %1258 = vmatprep.subr.mxu0 0.0
  %1259 = vmatpush1.msra.mxu0 %v1190
  %1260 = vmatprep.subr.mxu0 0.0
  %1261 = vmatpush1.msra.mxu0 %v1191
  %1262 = vmatprep.subr.mxu0 0.0
  %1263 = vmatpush1.msra.mxu0 %v1192
  %1264 = vmatprep.subr.mxu0 0.0
  %1265 = vmatpush1.msra.mxu0 %v1193
  %1266 = vmatprep.subr.mxu0 0.0
  %1267 = vmatpush1.msra.mxu0 %v1194
  %1268 = vmatprep.subr.mxu0 0.0
  %1269 = vmatpush1.msra.mxu0 %v1195
  %1270 = vmatprep.subr.mxu0 0.0
  %1271 = vmatpush1.msra.mxu0 %v1196
  %1272 = vmatprep.subr.mxu0 0.0
  %1273 = vmatpush1.msra.mxu0 %v1197
  %1274 = vmatprep.subr.mxu0 0.0
  %1275 = vmatpush1.msra.mxu0 %v1198
  %1276 = vmatprep.subr.mxu0 0.0
  %1277 = vmatpush1.msra.mxu0 0.0
  %1278 = vmatprep.subr.mxu0 0.0
  %1279 = vmatpush1.msra.mxu0 0.0
  %1280 = vmatprep.subr.mxu0 0.0
  %1281 = vmatpush1.msra.mxu0 0.0
  %1282 = vmatprep.subr.mxu0 0.0
  %1283 = vmatpush1.msra.mxu0 0.0
  %1284 = vmatprep.mubr.f32.mxu0 %v1200
  %1285 = vmatmul.mubr.f32.gmra.mrb[0].mxu0 %v1156
  %v1286 = vpop.f32.mrb[0].mxu0
  %v1287 = vadd.f32 0.0, %v1286
  %v1288 = vpop.f32.mrb[0].mxu0
  %1289 = vmatprep.mubr.f32.mxu0 %v1203
  %1290 = vmatmul.mubr.f32.gmra.mrb[0].mxu0 %v1158
  %v1291 = vpop.f32.mrb[0].mxu0
  %v1292 = vadd.f32 0.0, %v1291
  %v1293 = vpop.f32.mrb[0].mxu0
  %1294 = vmatprep.mubr.f32.mxu0 %v1206
  %1295 = vmatmul.mubr.f32.gmra.mrb[0].mxu0 %v1160
  %v1296 = vpop.f32.mrb[0].mxu0
  %v1297 = vadd.f32 0.0, %v1296
  %v1298 = vpop.f32.mrb[0].mxu0
  %1299 = vmatprep.mubr.f32.mxu0 %v1209
  %1300 = vmatmul.mubr.f32.gmra.mrb[0].mxu0 %v1162
  %v1301 = vpop.f32.mrb[0].mxu0
  %v1302 = vadd.f32 0.0, %v1301
  %v1303 = vpop.f32.mrb[0].mxu0
  %1304 = vmatprep.mubr.f32.mxu0 %v1212
  %1305 = vmatmul.mubr.f32.gmra.mrb[0].mxu0 %v1164
  %v1306 = vpop.f32.mrb[0].mxu0
  %v1307 = vadd.f32 0.0, %v1306
  %v1308 = vpop.f32.mrb[0].mxu0
  %1309 = vmatprep.mubr.f32.mxu0 %v1215
  %1310 = vmatmul.mubr.f32.gmra.mrb[0].mxu0 %v1166
  %v1311 = vpop.f32.mrb[0].mxu0
  %v1312 = vadd.f32 0.0, %v1311
  %v1313 = vpop.f32.mrb[0].mxu0
  %1314 = vmatprep.mubr.f32.mxu0 %v1218
  %1315 = vmatmul.mubr.f32.gmra.mrb[0].mxu0 %v1168
  %v1316 = vpop.f32.mrb[0].mxu0
  %v1317 = vadd.f32 0.0, %v1316
  %v1318 = vpop.f32.mrb[0].mxu0
  %1319 = vdwg.mxu0
  %v1320 = vadd.f32 %v1122, %v1287
  %v1321 = vadd.f32 %v1127, %v1292
  %v1322 = vadd.f32 %v1132, %v1297
  %v1323 = vadd.f32 %v1137, %v1302
  %v1324 = vadd.f32 %v1142, %v1307
  %v1325 = vadd.f32 %v1147, %v1312
  %v1326 = vadd.f32 %v1152, %v1317
  %v1327 = vld [vmem:[%s4] sm:$0x1]
  %v1329 = vlaneseq
  %v1330 = vshrl.u32 %v1329, 7
  %v1331 = vsub.s32 0, %v1330
  %v1332 = vrot.slane %v1327, %v1331
  %v1334 = vadd.f32 %v1320, %v1332
  %v1335 = vadd.f32 %v1321, %v1332
  %v1336 = vadd.f32 %v1322, %v1332
  %v1337 = vadd.f32 %v1323, %v1332
  %v1338 = vadd.f32 %v1324, %v1332
  %v1339 = vadd.f32 %v1325, %v1332
  %v1340 = vadd.f32 %v1326, %v1332
  %v1341 = vmax.f32 %v1334, 0.0
  %v1342 = vmax.f32 %v1335, 0.0
  %v1343 = vmax.f32 %v1336, 0.0
  %v1344 = vmax.f32 %v1337, 0.0
  %v1345 = vmax.f32 %v1338, 0.0
  %v1346 = vmax.f32 %v1339, 0.0
  %v1347 = vmax.f32 %v1340, 0.0
  %s1348 = scalar_lea.vmem [#allocation3], 8
  %1349 = vst.msk [vmem:[%s1348] sm:$0xff] %vm35, %v1341
  %1350 = vst.msk [vmem:[%s1348 + $0x8] sm:$0xff] %vm35, %v1342
  %1351 = vst.msk [vmem:[%s1348 + $0x10] sm:$0xff] %vm35, %v1343
  %1352 = vst.msk [vmem:[%s1348 + $0x18] sm:$0xff] %vm35, %v1344
  %1353 = vst.msk [vmem:[%s1348 + $0x20] sm:$0xff] %vm35, %v1345
  %1354 = vst.msk [vmem:[%s1348 + $0x28] sm:$0xff] %vm35, %v1346
  %1355 = vst.msk [vmem:[%s1348 + $0x30] sm:$0xff] %vm35, %v1347
  %v1356 = vld [vmem:[#allocation3] sm:$0xff]
  %v1357 = vld [vmem:[#allocation3 + $0x10] sm:$0xff]
  %v1358 = vld [vmem:[#allocation3 + $0x20] sm:$0xff]
  %v1359 = vld [vmem:[#allocation3 + $0x30] sm:$0xff]
  %v1360 = vld [vmem:[%s5] sm:$0xff]
  %v1361 = vld [vmem:[%s5 + $0x8] sm:$0xff]
  %v1362 = vld [vmem:[%s5 + $0x10] sm:$0xff]
  %v1363 = vld [vmem:[%s5 + $0x18] sm:$0xff]
  %v1364 = vld [vmem:[%s5 + $0x20] sm:$0xff]
  %v1365 = vld [vmem:[%s5 + $0x28] sm:$0xff]
  %v1366 = vld [vmem:[%s5 + $0x30] sm:$0xff]
  %v1367 = vld [vmem:[%s5 + $0x38] sm:$0xff]
  %v1368 = vld [vmem:[%s5 + $0x40] sm:$0xff]
  %v1369 = vld [vmem:[%s5 + $0x48] sm:$0xff]
  %v1370 = vld [vmem:[%s5 + $0x50] sm:$0xff]
  %v1371 = vld [vmem:[%s5 + $0x58] sm:$0xff]
  %v1372 = vld [vmem:[%s5 + $0x60] sm:$0xff]
  %v1373 = vld [vmem:[%s5 + $0x68] sm:$0xff]
  %v1374 = vld [vmem:[%s1348] sm:$0xff]
  %v1375 = vld [vmem:[%s1348 + $0x10] sm:$0xff]
  %v1376 = vld [vmem:[%s1348 + $0x20] sm:$0xff]
  %v1377 = vld [vmem:[%s1348 + $0x30] sm:$0xff]
  %s1378 = scalar_lea.vmem %s5, 112
  %v1379 = vld [vmem:[%s1378] sm:$0xff]
  %v1380 = vld [vmem:[%s1378 + $0x8] sm:$0xff]
  %v1381 = vld [vmem:[%s1378 + $0x10] sm:$0xff]
  %v1382 = vld [vmem:[%s1378 + $0x18] sm:$0xff]
  %v1383 = vld [vmem:[%s1378 + $0x20] sm:$0xff]
  %v1384 = vld [vmem:[%s1378 + $0x28] sm:$0xff]
  %v1385 = vld [vmem:[%s1378 + $0x30] sm:$0xff]
  %v1386 = vld [vmem:[%s1378 + $0x38] sm:$0xff]
  %v1387 = vld [vmem:[%s1378 + $0x40] sm:$0xff]
  %v1388 = vld [vmem:[%s1378 + $0x48] sm:$0xff]
  %v1389 = vld [vmem:[%s1378 + $0x50] sm:$0xff]
  %v1390 = vld [vmem:[%s1378 + $0x58] sm:$0xff]
  %v1391 = vld [vmem:[%s1378 + $0x60] sm:$0xff]
  %v1392 = vld [vmem:[%s1378 + $0x68] sm:$0xff]
  %v1394 = vsel %vm35, %v1374, 0
  %v1397 = vsel %vm35, %v1375, 0
  %v1400 = vsel %vm35, %v1376, 0
  %v1403 = vsel %vm35, %v1377, 0
  %1405 = vmatprep.subr.mxu0 0.0
  %1406 = vmatpush1.msra.mxu0 %v1379
  %1407 = vmatprep.subr.mxu0 0.0
  %1408 = vmatpush1.msra.mxu0 %v1380
  %1409 = vmatprep.subr.mxu0 0.0
  %1410 = vmatpush1.msra.mxu0 %v1381
  %1411 = vmatprep.subr.mxu0 0.0
  %1412 = vmatpush1.msra.mxu0 %v1382
  %1413 = vmatprep.subr.mxu0 0.0
  %1414 = vmatpush1.msra.mxu0 %v1383
  %1415 = vmatprep.subr.mxu0 0.0
  %1416 = vmatpush1.msra.mxu0 %v1384
  %1417 = vmatprep.subr.mxu0 0.0
  %1418 = vmatpush1.msra.mxu0 %v1385
  %1419 = vmatprep.subr.mxu0 0.0
  %1420 = vmatpush1.msra.mxu0 %v1386
  %1421 = vmatprep.subr.mxu0 0.0
  %1422 = vmatpush1.msra.mxu0 %v1387
  %1423 = vmatprep.subr.mxu0 0.0
  %1424 = vmatpush1.msra.mxu0 %v1388
  %1425 = vmatprep.subr.mxu0 0.0
  %1426 = vmatpush1.msra.mxu0 %v1389
  %1427 = vmatprep.subr.mxu0 0.0
  %1428 = vmatpush1.msra.mxu0 %v1390
  %1429 = vmatprep.subr.mxu0 0.0
  %1430 = vmatpush1.msra.mxu0 %v1391
  %1431 = vmatprep.subr.mxu0 0.0
  %1432 = vmatpush1.msra.mxu0 %v1392
  %1433 = vmatprep.subr.mxu0 0.0
  %1434 = vmatpush1.msra.mxu0 0.0
  %1435 = vmatprep.subr.mxu0 0.0
  %1436 = vmatpush1.msra.mxu0 0.0
  %1437 = vmatprep.subr.mxu0 0.0
  %1438 = vmatpush1.msra.mxu0 0.0
  %1439 = vmatprep.subr.mxu0 0.0
  %1440 = vmatpush1.msra.mxu0 0.0
  %1441 = vmatprep.subr.mxu0 0.0
  %1442 = vmatpush1.msra.mxu0 0.0
  %1443 = vmatprep.subr.mxu0 0.0
  %1444 = vmatpush1.msra.mxu0 0.0
  %1445 = vmatprep.subr.mxu0 0.0
  %1446 = vmatpush1.msra.mxu0 0.0
  %1447 = vmatprep.subr.mxu0 0.0
  %1448 = vmatpush1.msra.mxu0 0.0
  %1449 = vmatprep.subr.mxu0 0.0
  %1450 = vmatpush1.msra.mxu0 0.0
  %1451 = vmatprep.subr.mxu0 0.0
  %1452 = vmatpush1.msra.mxu0 0.0
  %1453 = vmatprep.subr.mxu0 0.0
  %1454 = vmatpush1.msra.mxu0 0.0
  %1455 = vmatprep.subr.mxu0 0.0
  %1456 = vmatpush1.msra.mxu0 0.0
  %1457 = vmatprep.subr.mxu0 0.0
  %1458 = vmatpush1.msra.mxu0 0.0
  %1459 = vmatprep.subr.mxu0 0.0
  %1460 = vmatpush1.msra.mxu0 0.0
  %1461 = vmatprep.subr.mxu0 0.0
  %1462 = vmatpush1.msra.mxu0 0.0
  %1463 = vmatprep.subr.mxu0 0.0
  %1464 = vmatpush1.msra.mxu0 0.0
  %1465 = vmatprep.subr.mxu0 0.0
  %1466 = vmatpush1.msra.mxu0 0.0
  %1467 = vmatprep.subr.mxu0 0.0
  %1468 = vmatpush1.msra.mxu0 0.0
  %1469 = vmatprep.mubr.f32.mxu0 0.0
  %1470 = vmatmul.mubr.f32.gmra.mrb[0].mxu0 %v1394
  %v1471 = vpop.f32.mrb[0].mxu0
  %v1472 = vadd.f32 0.0, %v1471
  %v1473 = vpop.f32.mrb[0].mxu0
  %1474 = vmatprep.mubr.f32.mxu0 0.0
  %1475 = vmatmul.mubr.f32.gmra.mrb[0].mxu0 %v1397
  %v1476 = vpop.f32.mrb[0].mxu0
  %v1477 = vadd.f32 0.0, %v1476
  %v1478 = vpop.f32.mrb[0].mxu0
  %1479 = vmatprep.mubr.f32.mxu0 0.0
  %1480 = vmatmul.mubr.f32.gmra.mrb[0].mxu0 %v1400
  %v1481 = vpop.f32.mrb[0].mxu0
  %v1482 = vadd.f32 0.0, %v1481
  %v1483 = vpop.f32.mrb[0].mxu0
  %1484 = vmatprep.mubr.f32.mxu0 0.0
  %1485 = vmatmul.mubr.f32.gmra.mrb[0].mxu0 %v1403
  %v1486 = vpop.f32.mrb[0].mxu0
  %v1487 = vadd.f32 0.0, %v1486
  %v1488 = vpop.f32.mrb[0].mxu0
  %1489 = vdwg.mxu0
  %v1491 = vsel %vm35, %v1356, 0
  %v1494 = vsel %vm35, %v1357, 0
  %v1497 = vsel %vm35, %v1358, 0
  %v1500 = vsel %vm35, %v1359, 0
  %1502 = vmatprep.subr.mxu0 0.0
  %1503 = vmatpush1.msra.mxu0 %v1360
  %1504 = vmatprep.subr.mxu0 0.0
  %1505 = vmatpush1.msra.mxu0 %v1361
  %1506 = vmatprep.subr.mxu0 0.0
  %1507 = vmatpush1.msra.mxu0 %v1362
  %1508 = vmatprep.subr.mxu0 0.0
  %1509 = vmatpush1.msra.mxu0 %v1363
  %1510 = vmatprep.subr.mxu0 0.0
  %1511 = vmatpush1.msra.mxu0 %v1364
  %1512 = vmatprep.subr.mxu0 0.0
  %1513 = vmatpush1.msra.mxu0 %v1365
  %1514 = vmatprep.subr.mxu0 0.0
  %1515 = vmatpush1.msra.mxu0 %v1366
  %1516 = vmatprep.subr.mxu0 0.0
  %1517 = vmatpush1.msra.mxu0 %v1367
  %1518 = vmatprep.subr.mxu0 0.0
  %1519 = vmatpush1.msra.mxu0 %v1368
  %1520 = vmatprep.subr.mxu0 0.0
  %1521 = vmatpush1.msra.mxu0 %v1369
  %1522 = vmatprep.subr.mxu0 0.0
  %1523 = vmatpush1.msra.mxu0 %v1370
  %1524 = vmatprep.subr.mxu0 0.0
  %1525 = vmatpush1.msra.mxu0 %v1371
  %1526 = vmatprep.subr.mxu0 0.0
  %1527 = vmatpush1.msra.mxu0 %v1372
  %1528 = vmatprep.subr.mxu0 0.0
  %1529 = vmatpush1.msra.mxu0 %v1373
  %1530 = vmatprep.subr.mxu0 0.0
  %1531 = vmatpush1.msra.mxu0 0.0
  %1532 = vmatprep.subr.mxu0 0.0
  %1533 = vmatpush1.msra.mxu0 0.0
  %1534 = vmatprep.subr.mxu0 0.0
  %1535 = vmatpush1.msra.mxu0 0.0
  %1536 = vmatprep.subr.mxu0 0.0
  %1537 = vmatpush1.msra.mxu0 0.0
  %1538 = vmatprep.subr.mxu0 0.0
  %1539 = vmatpush1.msra.mxu0 0.0
  %1540 = vmatprep.subr.mxu0 0.0
  %1541 = vmatpush1.msra.mxu0 0.0
  %1542 = vmatprep.subr.mxu0 0.0
  %1543 = vmatpush1.msra.mxu0 0.0
  %1544 = vmatprep.subr.mxu0 0.0
  %1545 = vmatpush1.msra.mxu0 0.0
  %1546 = vmatprep.subr.mxu0 0.0
  %1547 = vmatpush1.msra.mxu0 0.0
  %1548 = vmatprep.subr.mxu0 0.0
  %1549 = vmatpush1.msra.mxu0 0.0
  %1550 = vmatprep.subr.mxu0 0.0
  %1551 = vmatpush1.msra.mxu0 0.0
  %1552 = vmatprep.subr.mxu0 0.0
  %1553 = vmatpush1.msra.mxu0 0.0
  %1554 = vmatprep.subr.mxu0 0.0
  %1555 = vmatpush1.msra.mxu0 0.0
  %1556 = vmatprep.subr.mxu0 0.0
  %1557 = vmatpush1.msra.mxu0 0.0
  %1558 = vmatprep.subr.mxu0 0.0
  %1559 = vmatpush1.msra.mxu0 0.0
  %1560 = vmatprep.subr.mxu0 0.0
  %1561 = vmatpush1.msra.mxu0 0.0
  %1562 = vmatprep.subr.mxu0 0.0
  %1563 = vmatpush1.msra.mxu0 0.0
  %1564 = vmatprep.subr.mxu0 0.0
  %1565 = vmatpush1.msra.mxu0 0.0
  %1566 = vmatprep.mubr.f32.mxu0 0.0
  %1567 = vmatmul.mubr.f32.gmra.mrb[0].mxu0 %v1491
  %v1568 = vpop.f32.mrb[0].mxu0
  %v1569 = vadd.f32 %v1472, %v1568
  %v1570 = vpop.f32.mrb[0].mxu0
  %1571 = vmatprep.mubr.f32.mxu0 0.0
  %1572 = vmatmul.mubr.f32.gmra.mrb[0].mxu0 %v1494
  %v1573 = vpop.f32.mrb[0].mxu0
  %v1574 = vadd.f32 %v1477, %v1573
  %v1575 = vpop.f32.mrb[0].mxu0
  %1576 = vmatprep.mubr.f32.mxu0 0.0
  %1577 = vmatmul.mubr.f32.gmra.mrb[0].mxu0 %v1497
  %v1578 = vpop.f32.mrb[0].mxu0
  %v1579 = vadd.f32 %v1482, %v1578
  %v1580 = vpop.f32.mrb[0].mxu0
  %1581 = vmatprep.mubr.f32.mxu0 0.0
  %1582 = vmatmul.mubr.f32.gmra.mrb[0].mxu0 %v1500
  %v1583 = vpop.f32.mrb[0].mxu0
  %v1584 = vadd.f32 %v1487, %v1583
  %v1585 = vpop.f32.mrb[0].mxu0
  %1586 = vdwg.mxu0
  %s1587 = scalar_lea.vmem [#allocation3], 16
  %v1588 = vld [vmem:[%s1587] sm:$0xff]
  %v1589 = vld [vmem:[%s1587 + $0x10] sm:$0xff]
  %v1590 = vld [vmem:[%s1587 + $0x20] sm:$0xff]
  %v1591 = vld [vmem:[%s1587 + $0x30] sm:$0xff]
  %s1592 = scalar_lea.vmem %s5, 224
  %v1593 = vld [vmem:[%s1592] sm:$0xff]
  %v1594 = vld [vmem:[%s1592 + $0x8] sm:$0xff]
  %v1595 = vld [vmem:[%s1592 + $0x10] sm:$0xff]
  %v1596 = vld [vmem:[%s1592 + $0x18] sm:$0xff]
  %v1597 = vld [vmem:[%s1592 + $0x20] sm:$0xff]
  %v1598 = vld [vmem:[%s1592 + $0x28] sm:$0xff]
  %v1599 = vld [vmem:[%s1592 + $0x30] sm:$0xff]
  %v1600 = vld [vmem:[%s1592 + $0x38] sm:$0xff]
  %v1601 = vld [vmem:[%s1592 + $0x40] sm:$0xff]
  %v1602 = vld [vmem:[%s1592 + $0x48] sm:$0xff]
  %v1603 = vld [vmem:[%s1592 + $0x50] sm:$0xff]
  %v1604 = vld [vmem:[%s1592 + $0x58] sm:$0xff]
  %v1605 = vld [vmem:[%s1592 + $0x60] sm:$0xff]
  %v1606 = vld [vmem:[%s1592 + $0x68] sm:$0xff]
  %v1608 = vsel %vm35, %v1588, 0
  %v1611 = vsel %vm35, %v1589, 0
  %v1614 = vsel %vm35, %v1590, 0
  %v1617 = vsel %vm35, %v1591, 0
  %1619 = vmatprep.subr.mxu0 0.0
  %1620 = vmatpush1.msra.mxu0 %v1593
  %1621 = vmatprep.subr.mxu0 0.0
  %1622 = vmatpush1.msra.mxu0 %v1594
  %1623 = vmatprep.subr.mxu0 0.0
  %1624 = vmatpush1.msra.mxu0 %v1595
  %1625 = vmatprep.subr.mxu0 0.0
  %1626 = vmatpush1.msra.mxu0 %v1596
  %1627 = vmatprep.subr.mxu0 0.0
  %1628 = vmatpush1.msra.mxu0 %v1597
  %1629 = vmatprep.subr.mxu0 0.0
  %1630 = vmatpush1.msra.mxu0 %v1598
  %1631 = vmatprep.subr.mxu0 0.0
  %1632 = vmatpush1.msra.mxu0 %v1599
  %1633 = vmatprep.subr.mxu0 0.0
  %1634 = vmatpush1.msra.mxu0 %v1600
  %1635 = vmatprep.subr.mxu0 0.0
  %1636 = vmatpush1.msra.mxu0 %v1601
  %1637 = vmatprep.subr.mxu0 0.0
  %1638 = vmatpush1.msra.mxu0 %v1602
  %1639 = vmatprep.subr.mxu0 0.0
  %1640 = vmatpush1.msra.mxu0 %v1603
  %1641 = vmatprep.subr.mxu0 0.0
  %1642 = vmatpush1.msra.mxu0 %v1604
  %1643 = vmatprep.subr.mxu0 0.0
  %1644 = vmatpush1.msra.mxu0 %v1605
  %1645 = vmatprep.subr.mxu0 0.0
  %1646 = vmatpush1.msra.mxu0 %v1606
  %1647 = vmatprep.subr.mxu0 0.0
  %1648 = vmatpush1.msra.mxu0 0.0
  %1649 = vmatprep.subr.mxu0 0.0
  %1650 = vmatpush1.msra.mxu0 0.0
  %1651 = vmatprep.subr.mxu0 0.0
  %1652 = vmatpush1.msra.mxu0 0.0
  %1653 = vmatprep.subr.mxu0 0.0
  %1654 = vmatpush1.msra.mxu0 0.0
  %1655 = vmatprep.subr.mxu0 0.0
  %1656 = vmatpush1.msra.mxu0 0.0
  %1657 = vmatprep.subr.mxu0 0.0
  %1658 = vmatpush1.msra.mxu0 0.0
  %1659 = vmatprep.subr.mxu0 0.0
  %1660 = vmatpush1.msra.mxu0 0.0
  %1661 = vmatprep.subr.mxu0 0.0
  %1662 = vmatpush1.msra.mxu0 0.0
  %1663 = vmatprep.subr.mxu0 0.0
  %1664 = vmatpush1.msra.mxu0 0.0
  %1665 = vmatprep.subr.mxu0 0.0
  %1666 = vmatpush1.msra.mxu0 0.0
  %1667 = vmatprep.subr.mxu0 0.0
  %1668 = vmatpush1.msra.mxu0 0.0
  %1669 = vmatprep.subr.mxu0 0.0
  %1670 = vmatpush1.msra.mxu0 0.0
  %1671 = vmatprep.subr.mxu0 0.0
  %1672 = vmatpush1.msra.mxu0 0.0
  %1673 = vmatprep.subr.mxu0 0.0
  %1674 = vmatpush1.msra.mxu0 0.0
  %1675 = vmatprep.subr.mxu0 0.0
  %1676 = vmatpush1.msra.mxu0 0.0
  %1677 = vmatprep.subr.mxu0 0.0
  %1678 = vmatpush1.msra.mxu0 0.0
  %1679 = vmatprep.subr.mxu0 0.0
  %1680 = vmatpush1.msra.mxu0 0.0
  %1681 = vmatprep.subr.mxu0 0.0
  %1682 = vmatpush1.msra.mxu0 0.0
  %1683 = vmatprep.mubr.f32.mxu0 0.0
  %1684 = vmatmul.mubr.f32.gmra.mrb[0].mxu0 %v1608
  %v1685 = vpop.f32.mrb[0].mxu0
  %v1686 = vadd.f32 0.0, %v1685
  %v1687 = vpop.f32.mrb[0].mxu0
  %1688 = vmatprep.mubr.f32.mxu0 0.0
  %1689 = vmatmul.mubr.f32.gmra.mrb[0].mxu0 %v1611
  %v1690 = vpop.f32.mrb[0].mxu0
  %v1691 = vadd.f32 0.0, %v1690
  %v1692 = vpop.f32.mrb[0].mxu0
  %1693 = vmatprep.mubr.f32.mxu0 0.0
  %1694 = vmatmul.mubr.f32.gmra.mrb[0].mxu0 %v1614
  %v1695 = vpop.f32.mrb[0].mxu0
  %v1696 = vadd.f32 0.0, %v1695
  %v1697 = vpop.f32.mrb[0].mxu0
  %1698 = vmatprep.mubr.f32.mxu0 0.0
  %1699 = vmatmul.mubr.f32.gmra.mrb[0].mxu0 %v1617
  %v1700 = vpop.f32.mrb[0].mxu0
  %v1701 = vadd.f32 0.0, %v1700
  %v1702 = vpop.f32.mrb[0].mxu0
  %1703 = vdwg.mxu0
  %v1704 = vadd.f32 %v1569, %v1686
  %v1705 = vadd.f32 %v1574, %v1691
  %v1706 = vadd.f32 %v1579, %v1696
  %v1707 = vadd.f32 %v1584, %v1701
  %v1708 = vld [vmem:[%s6] sm:$0x1]
  %v1710 = vlaneseq
  %v1711 = vshrl.u32 %v1710, 7
  %v1712 = vsub.s32 0, %v1711
  %v1713 = vrot.slane %v1708, %v1712
  %v1715 = vadd.f32 %v1704, %v1713
  %v1716 = vadd.f32 %v1705, %v1713
  %v1717 = vadd.f32 %v1706, %v1713
  %v1718 = vadd.f32 %v1707, %v1713
  %v1719 = vmax.f32 %v1715, 0.0
  %v1720 = vmax.f32 %v1716, 0.0
  %v1721 = vmax.f32 %v1717, 0.0
  %v1722 = vmax.f32 %v1718, 0.0
  %v1723 = vld [vmem:[%s7] sm:$0xff]
  %v1724 = vld [vmem:[%s7 + $0x8] sm:$0xff]
  %v1725 = vld [vmem:[%s7 + $0x10] sm:$0xff]
  %v1726 = vld [vmem:[%s7 + $0x18] sm:$0xff]
  %v1727 = vld [vmem:[%s7 + $0x20] sm:$0xff]
  %v1728 = vld [vmem:[%s7 + $0x28] sm:$0xff]
  %v1729 = vld [vmem:[%s7 + $0x30] sm:$0xff]
  %v1730 = vld [vmem:[%s7 + $0x38] sm:$0xff]
  %vm1731 = vcmask 523264
  %v1733 = vsel %vm1731, %v1719, 0
  %v1736 = vsel %vm1731, %v1720, 0
  %v1739 = vsel %vm1731, %v1721, 0
  %v1742 = vsel %vm1731, %v1722, 0
  %1744 = vmatprep.subr.mxu0 0.0
  %1745 = vmatpush1.msra.mxu0 %v1723
  %1746 = vmatprep.subr.mxu0 0.0
  %1747 = vmatpush1.msra.mxu0 %v1724
  %1748 = vmatprep.subr.mxu0 0.0
  %1749 = vmatpush1.msra.mxu0 %v1725
  %1750 = vmatprep.subr.mxu0 0.0
  %1751 = vmatpush1.msra.mxu0 %v1726
  %1752 = vmatprep.subr.mxu0 0.0
  %1753 = vmatpush1.msra.mxu0 %v1727
  %1754 = vmatprep.subr.mxu0 0.0
  %1755 = vmatpush1.msra.mxu0 %v1728
  %1756 = vmatprep.subr.mxu0 0.0
  %1757 = vmatpush1.msra.mxu0 %v1729
  %1758 = vmatprep.subr.mxu0 0.0
  %1759 = vmatpush1.msra.mxu0 %v1730
  %1760 = vmatprep.subr.mxu0 0.0
  %1761 = vmatpush1.msra.mxu0 0.0
  %1762 = vmatprep.subr.mxu0 0.0
  %1763 = vmatpush1.msra.mxu0 0.0
  %1764 = vmatprep.subr.mxu0 0.0
  %1765 = vmatpush1.msra.mxu0 0.0
  %1766 = vmatprep.subr.mxu0 0.0
  %1767 = vmatpush1.msra.mxu0 0.0
  %1768 = vmatprep.subr.mxu0 0.0
  %1769 = vmatpush1.msra.mxu0 0.0
  %1770 = vmatprep.subr.mxu0 0.0
  %1771 = vmatpush1.msra.mxu0 0.0
  %1772 = vmatprep.subr.mxu0 0.0
  %1773 = vmatpush1.msra.mxu0 0.0
  %1774 = vmatprep.subr.mxu0 0.0
  %1775 = vmatpush1.msra.mxu0 0.0
  %1776 = vmatprep.subr.mxu0 0.0
  %1777 = vmatpush1.msra.mxu0 0.0
  %1778 = vmatprep.subr.mxu0 0.0
  %1779 = vmatpush1.msra.mxu0 0.0
  %1780 = vmatprep.subr.mxu0 0.0
  %1781 = vmatpush1.msra.mxu0 0.0
  %1782 = vmatprep.subr.mxu0 0.0
  %1783 = vmatpush1.msra.mxu0 0.0
  %1784 = vmatprep.subr.mxu0 0.0
  %1785 = vmatpush1.msra.mxu0 0.0
  %1786 = vmatprep.subr.mxu0 0.0
  %1787 = vmatpush1.msra.mxu0 0.0
  %1788 = vmatprep.subr.mxu0 0.0
  %1789 = vmatpush1.msra.mxu0 0.0
  %1790 = vmatprep.subr.mxu0 0.0
  %1791 = vmatpush1.msra.mxu0 0.0
  %1792 = vmatprep.subr.mxu0 0.0
  %1793 = vmatpush1.msra.mxu0 0.0
  %1794 = vmatprep.subr.mxu0 0.0
  %1795 = vmatpush1.msra.mxu0 0.0
  %1796 = vmatprep.subr.mxu0 0.0
  %1797 = vmatpush1.msra.mxu0 0.0
  %1798 = vmatprep.subr.mxu0 0.0
  %1799 = vmatpush1.msra.mxu0 0.0
  %1800 = vmatprep.subr.mxu0 0.0
  %1801 = vmatpush1.msra.mxu0 0.0
  %1802 = vmatprep.subr.mxu0 0.0
  %1803 = vmatpush1.msra.mxu0 0.0
  %1804 = vmatprep.subr.mxu0 0.0
  %1805 = vmatpush1.msra.mxu0 0.0
  %1806 = vmatprep.subr.mxu0 0.0
  %1807 = vmatpush1.msra.mxu0 0.0
  %1808 = vmatprep.mubr.f32.mxu0 0.0
  %1809 = vmatmul.mubr.f32.gmra.mrb[0].mxu0 %v1733
  %v1810 = vpop.f32.mrb[0].mxu0
  %v1811 = vadd.f32 0.0, %v1810
  %v1812 = vpop.f32.mrb[0].mxu0
  %1813 = vmatprep.mubr.f32.mxu0 0.0
  %1814 = vmatmul.mubr.f32.gmra.mrb[0].mxu0 %v1736
  %v1815 = vpop.f32.mrb[0].mxu0
  %v1816 = vadd.f32 0.0, %v1815
  %v1817 = vpop.f32.mrb[0].mxu0
  %1818 = vmatprep.mubr.f32.mxu0 0.0
  %1819 = vmatmul.mubr.f32.gmra.mrb[0].mxu0 %v1739
  %v1820 = vpop.f32.mrb[0].mxu0
  %v1821 = vadd.f32 0.0, %v1820
  %v1822 = vpop.f32.mrb[0].mxu0
  %1823 = vmatprep.mubr.f32.mxu0 0.0
  %1824 = vmatmul.mubr.f32.gmra.mrb[0].mxu0 %v1742
  %v1825 = vpop.f32.mrb[0].mxu0
  %v1826 = vadd.f32 0.0, %v1825
  %v1827 = vpop.f32.mrb[0].mxu0
  %1828 = vdwg.mxu0
  %vm1829 = vcmask 130048
  %v1830 = vsel %vm1829, %v1811, 0.0
  %v1831 = vsel %vm1829, %v1816, 0.0
  %v1832 = vadd.f32 %v1830, %v1831
  %v1833 = vsel %vm1829, %v1821, 0.0
  %v1834 = vadd.f32 %v1832, %v1833
  %v1835 = vsel %vm1829, %v1826, 0.0
  %v1836 = vadd.f32 %v1834, %v1835
  %1837 = vst.msk [vmem:[%s8] sm:$0xff] %vm1829, %v1836
  // Predicated region
  $region34: #{mnist_cnn_forward.1} parent=0 // pred_check
    _
  $region35: #{mnist_cnn_forward.1} parent=0 // pred_check_branch
    %1839 = sbr.rel (0) target = $region37
  $region36: #{mnist_cnn_forward.1} parent=0 // pred_region
    _
  $region37: #{mnist_cnn_forward.1} parent=0 // pred_fallthru
    _
  // Predicated region
  $region38: #{mnist_cnn_forward.1} parent=0 // pred_check
    _
  $region39: #{mnist_cnn_forward.1} parent=0 // pred_check_branch
    %1841 = sbr.rel (0) target = $region41
  $region40: #{mnist_cnn_forward.1} parent=0 // pred_region
    _
  $region41: #{mnist_cnn_forward.1} parent=0 // pred_fallthru
    _

</llo_original>
